<compile_context>
chip_gen: v7x
topology: tpu7x:2x2x1
jax: 0.10.0
libtpu: 0.0.40
codegen_flags: <defaults>
</compile_context>

<pallas_src>
import functools

import jax
import jax.numpy as jnp
from jax.experimental import pallas as pl
from jax.experimental.pallas import tpu as pltpu

_NEG_INF = -1e30


def _ru(x, m):
    return ((x + m - 1) // m) * m


def _concrete_int(x, fallback):
    """int(x) when x is concrete (eager glue); fallback under tracing."""
    try:
        return int(x)
    except Exception:
        return fallback


def _vmem_limit_bytes():
    # v5e/v6e have 128 MiB of VMEM, v7x only 64 MiB: derive the limit from the
    # device instead of sharing one constant across generations.
    try:
        cap = int(pltpu.get_tpu_info().vmem_capacity_bytes)
    except Exception:
        cap = 64 * 1024 * 1024
    return max(32 * 1024 * 1024, min(cap - 16 * 1024 * 1024, 100 * 1024 * 1024))


_VMEM_LIMIT = _vmem_limit_bytes()


def _cparams(sem):
    return pltpu.CompilerParams(dimension_semantics=sem,
                                vmem_limit_bytes=_VMEM_LIMIT)


# ----------------------------------------------------------------------------
# Pallas kernels
# ----------------------------------------------------------------------------
def _push_kernel(meta_ref, o_ref):
    """Bilinear splat (GridPushCount), banded over output rows.

    meta_ref: (tk, 4) block of (row, col, weight, value) rows, pre-binned so
              that band `b = program_id(0)` only sees rows whose output row
              lies inside [b*band, (b+1)*band).
    o_ref   : (band, 2*Wm) band of the output -- left half pushed image,
              right half count map.  Accumulated in place over the K axis.
    """
    b = pl.program_id(0)
    k = pl.program_id(1)

    @pl.when(k == 0)
    def _():
        o_ref[...] = jnp.zeros_like(o_ref)

    band = o_ref.shape[0]
    wm = o_ref.shape[1] // 2
    m = meta_ref[...]
    yv, xv, wv, vv = m[:, 0:1], m[:, 1:2], m[:, 2:3], m[:, 3:4]
    tk = m.shape[0]

    rows = (jax.lax.broadcasted_iota(jnp.int32, (tk, band), 1)
            + b * band).astype(jnp.float32)
    ry = (rows == yv).astype(jnp.bfloat16)                      # exact 0/1

    cols = jax.lax.broadcasted_iota(jnp.int32, (tk, 2 * wm), 1)
    colm = jnp.where(cols < wm, cols, cols - wm).astype(jnp.float32)
    scale = jnp.where(cols < wm, vv, 1.0)                       # image | ones
    rx = ((colm == xv).astype(jnp.float32) * wv * scale).astype(jnp.bfloat16)

    o_ref[...] += jax.lax.dot_general(
        ry, rx, (((0,), (0,)), ((), ())),                       # ry^T @ rx
        preferred_element_type=jnp.float32)


def _pull_kernel(win_ref, meta_ref, p_ref, o_ref):
    """Bilinear gather (GridPull), windowed over mean space.

    win_ref : scalar-prefetched (n_native_tiles,) int32 start block of the
              mean-space window touched by this native tile.
    meta_ref: (tn, 8) block -- 4 flat corner indices + 4 bilinear weights.
    p_ref   : (C_pad, tk) bf16 block of the mean-space prediction, positioned
              at block win[i] + k by the index_map.
    """
    i = pl.program_id(0)
    k = pl.program_id(1)

    @pl.when(k == 0)
    def _():
        o_ref[...] = jnp.zeros_like(o_ref)

    m = meta_ref[...]
    tn = m.shape[0]
    tk = p_ref.shape[1]
    base = (win_ref[i] + k) * tk
    cols = (jax.lax.broadcasted_iota(jnp.int32, (tn, tk), 1)
            + base).astype(jnp.float32)
    hot = jnp.zeros((tn, tk), jnp.float32)
    for c in range(4):
        hot = hot + jnp.where(cols == m[:, c:c + 1], m[:, 4 + c:5 + c], 0.0)

    o_ref[...] += jax.lax.dot_general(
        p_ref[...], hot.astype(jnp.bfloat16), (((1,), (1,)), ((), ())),
        preferred_element_type=jnp.float32)


def _conv_kernel(x0_ref, x1_ref, w_ref, b_ref, a_ref, c_ref, y_ref, *,
                 wp2, apply_act, neg_slope):
    """Fused (folded-BN scale/shift + LeakyReLU) -> 3x3 conv matmul.

    The input is a flat padded slab; two consecutive lane blocks are stitched
    together so the nine 3x3 taps become static lane-shifted VMEM slices
    (offsets dy*wp2 + dx), concatenated into a (9*Cin_pad, tn) patch matrix.
    No im2col ever touches HBM.
    """
    x = jnp.concatenate([x0_ref[...], x1_ref[...]], axis=1)     # (Cin, 2*tn)
    z = x * a_ref[...] + c_ref[...]
    if apply_act:
        z = jnp.where(z >= 0.0, z, neg_slope * z)

    tn = x0_ref.shape[1]
    taps = [z[:, dy * wp2 + dx: dy * wp2 + dx + tn]
            for dy in range(3) for dx in range(3)]
    patches = jnp.concatenate(taps, axis=0).astype(jnp.bfloat16)
    y_ref[...] = (jnp.dot(w_ref[...], patches,
                          preferred_element_type=jnp.float32) + b_ref[...])


def _stats_kernel(y_ref, o_ref, *, n_valid):
    """Per-channel sum / sum-of-squares reduction (BatchNorm statistics)."""
    i = pl.program_id(0)

    @pl.when(i == 0)
    def _():
        o_ref[...] = jnp.zeros_like(o_ref)

    y = y_ref[...]
    tn = y.shape[1]
    col = jax.lax.broadcasted_iota(jnp.int32, y.shape, 1) + i * tn
    ym = jnp.where(col < n_valid, y, 0.0)
    s = jnp.sum(ym, axis=1, keepdims=True)
    q = jnp.sum(ym * ym, axis=1, keepdims=True)
    oc = jax.lax.broadcasted_iota(jnp.int32, o_ref.shape, 1)
    o_ref[...] += jnp.where(oc == 0, s, 0.0) + jnp.where(oc == 1, q, 0.0)


def _bg_softmax_kernel(gmax_ref, p_ref, o_ref, *, n_classes, bg_class):
    """bg = (sum_c pred == 0) * (1 + max(pred)); pred[bg_class] += bg; softmax.

    Layout (C_pad, N): class reduce over sublanes, spatial on lanes.
    NOTE: the `s == 0` background test relies on the pull producing *exact*
    zeros outside the FOV, which holds because zero weights make the one-hot
    gather columns exactly zero (even with bf16 operands).
    """
    p = p_ref[...]
    row = jax.lax.broadcasted_iota(jnp.int32, p.shape, 0)
    valid = row < n_classes
    s = jnp.sum(jnp.where(valid, p, 0.0), axis=0, keepdims=True)
    bg = jnp.where(s == 0.0, 1.0 + gmax_ref[0], 0.0)            # (1, tn)
    p = p + jnp.where(row == bg_class, bg, 0.0)
    p = jnp.where(valid, p, _NEG_INF)
    mx = jnp.max(p, axis=0, keepdims=True)
    e = jnp.exp(p - mx)
    o_ref[...] = e / jnp.sum(e, axis=0, keepdims=True)


# ----------------------------------------------------------------------------
# Grid / interpolation glue (pure index math, O(Nn))
# ----------------------------------------------------------------------------
def compute_grid(mat_native_n, shape_native, mean_mat):
    """mat = mean_mat^{-1} @ mat_native ; grid[i,j] = mat @ (i, j, 1)."""
    mat = jnp.linalg.solve(mean_mat, mat_native_n)               # (3, 3)
    h, w = shape_native
    ii, jj = jnp.meshgrid(jnp.arange(h, dtype=jnp.float32),
                          jnp.arange(w, dtype=jnp.float32), indexing="ij")
    coords = jnp.stack([ii, jj, jnp.ones_like(ii)], axis=-1)     # (h, w, 3)
    g = coords @ mat.T
    return g[..., :2]                                            # (h, w, 2)


def _corner_meta(grid, mean_shape):
    """Per native voxel: the 4 bilinear corner (row, col, weight) triples.

    bound='dct2' (reflect-including-edge, single bounce), extrapolate=False.
    TODO(synk): multi-bounce reflection for coordinates far outside the FOV.
    """
    hm, wm = mean_shape
    gy = grid[..., 0].reshape(-1)
    gx = grid[..., 1].reshape(-1)
    y0 = jnp.floor(gy)
    x0 = jnp.floor(gx)
    wy = gy - y0
    wx = gx - x0
    inb = ((gy >= -0.5) & (gy <= hm - 0.5) &
           (gx >= -0.5) & (gx <= wm - 0.5)).astype(jnp.float32)

    def refl(i, n):
        i = jnp.where(i < 0, -i - 1, i)
        i = jnp.where(i >= n, 2 * n - 1 - i, i)
        return i

    y0i = y0.astype(jnp.int32)
    x0i = x0.astype(jnp.int32)
    ys, xs, ws = [], [], []
    for dy, wgt_y in ((0, 1.0 - wy), (1, wy)):
        for dx, wgt_x in ((0, 1.0 - wx), (1, wx)):
            ys.append(refl(y0i + dy, hm).astype(jnp.float32))
            xs.append(refl(x0i + dx, wm).astype(jnp.float32))
            ws.append(wgt_y * wgt_x * inb)
    return ys, xs, ws


# ----------------------------------------------------------------------------
# GridPushCount / GridPull wrappers
# ----------------------------------------------------------------------------
def grid_push_count(img2d, grid, mean_shape, *, tile_k=512, band_rows=8):
    """Splat a native image into mean space; returns (pushed, count)."""
    hm, wm = mean_shape
    nn = img2d.size
    ys, xs, ws = _corner_meta(grid, mean_shape)
    val = img2d.reshape(-1).astype(jnp.float32)
    meta = jnp.concatenate(
        [jnp.stack([ys[c], xs[c], ws[c], val], axis=1) for c in range(4)],
        axis=0)                                                  # (4*Nn, 4)
    k_rows = 4 * nn

    hm_pad = _ru(hm, 8)
    band_rows = _ru(min(band_rows, hm_pad), 8)
    if hm_pad % band_rows != 0:
        band_rows = hm_pad                     # single band
    n_bands = hm_pad // band_rows

    band = jnp.clip(meta[:, 0], 0, hm - 1).astype(jnp.int32) // band_rows
    counts = jnp.zeros((n_bands,), jnp.int32).at[band].add(1)
    max_count = _concrete_int(jnp.max(counts), -1) if n_bands > 1 else -1

    if max_count < 0:
        # fallback (single band over the full height; also used under jit)
        n_bands, band_rows = 1, hm_pad
        kp_raw = k_rows
    else:
        kp_raw = max(max_count, 1)

    tk = tile_k if kp_raw >= tile_k else _ru(kp_raw, 8)
    kp_band = _ru(kp_raw, tk)
    kpb = kp_band // tk

    null = jnp.array([-1.0, -1.0, 0.0, 0.0], jnp.float32)
    binned = jnp.tile(null[None, :], (n_bands * kp_band, 1))
    if max_count < 0:
        binned = binned.at[:k_rows].set(meta)
    else:
        order = jnp.argsort(band)
        band_s = band[order]
        starts = jnp.concatenate(
            [jnp.zeros((1,), jnp.int32), jnp.cumsum(counts)[:-1]])
        rank = jnp.arange(k_rows, dtype=jnp.int32) - starts[band_s]
        dest = band_s * kp_band + rank
        binned = binned.at[dest].set(meta[order])

    out = pl.pallas_call(
        _push_kernel,
        grid=(n_bands, kpb),
        in_specs=[pl.BlockSpec((tk, 4), lambda b, k: (b * kpb + k, 0))],
        out_specs=pl.BlockSpec((band_rows, 2 * wm), lambda b, k: (b, 0)),
        out_shape=jax.ShapeDtypeStruct((n_bands * band_rows, 2 * wm),
                                       jnp.float32),
        compiler_params=_cparams(("parallel", "arbitrary")),
    )(binned)
    out = out[:hm]
    return out[:, :wm], out[:, wm:]


def grid_pull(pred_cm, grid, mean_shape, native_shape, *,
              tile_n=512, tile_k=512):
    """Pull a channels-major mean-space prediction to native space.

    pred_cm: (C_pad, Hm*Wm) f32 with padded channel rows exactly zero.
    Returns (C_pad, Nn_pad) f32; only [:, :h*w] columns are valid.
    """
    hm, wm = mean_shape
    c_pad = pred_cm.shape[0]
    nm = hm * wm
    h, w = native_shape
    nn = h * w

    ys, xs, ws = _corner_meta(grid, mean_shape)
    idx = [ys[c] * float(wm) + xs[c] for c in range(4)]
    meta = jnp.stack(idx + ws, axis=1)                           # (Nn, 8)

    tn = tile_n if nn >= tile_n else _ru(nn, 8)
    nn_pad = _ru(nn, tn)
    if nn_pad > nn:                     # pad with edge rows, zero weights
        pad = jnp.tile(meta[nn - 1:nn], (nn_pad - nn, 1)).at[:, 4:].set(0.0)
        meta = jnp.concatenate([meta, pad], axis=0)

    tk = tile_k if nm >= tile_k else _ru(nm, 128)
    nkt = _ru(nm, tk) // tk
    nm_pad = nkt * tk
    pred_b = jnp.pad(pred_cm, ((0, 0), (0, nm_pad - nm))).astype(jnp.bfloat16)

    # per-native-tile mean-space window (scalar-prefetched block starts)
    idx_t = meta[:, :4].reshape(nn_pad // tn, tn * 4)
    win = jnp.floor(jnp.min(idx_t, axis=1) / tk).astype(jnp.int32)
    last = jnp.floor(jnp.max(idx_t, axis=1) / tk).astype(jnp.int32)
    n_kwin = _concrete_int(jnp.max(last - win + 1), nkt)
    n_kwin = min(max(n_kwin, 1), nkt)
    if n_kwin == nkt:
        win = jnp.zeros_like(win)
    else:
        win = jnp.clip(win, 0, nkt - n_kwin)

    return pl.pallas_call(
        _pull_kernel,
        grid_spec=pltpu.PrefetchScalarGridSpec(
            num_scalar_prefetch=1,
            grid=(nn_pad // tn, n_kwin),
            in_specs=[pl.BlockSpec((tn, 8), lambda i, k, win: (i, 0)),
                      pl.BlockSpec((c_pad, tk),
                                   lambda i, k, win: (0, win[i] + k))],
            out_specs=pl.BlockSpec((c_pad, tn), lambda i, k, win: (0, i))),
        out_shape=jax.ShapeDtypeStruct((c_pad, nn_pad), jnp.float32),
        compiler_params=_cparams(("parallel", "arbitrary")),
    )(win, meta, pred_b)


def bg_softmax(pred_nat, gmax, n_classes, bg_class, *, tile_n=2048):
    c_pad, npix = pred_nat.shape
    tn = min(tile_n, _ru(npix, 128))
    np2 = _ru(npix, tn)
    if np2 > npix:
        pred_nat = jnp.pad(pred_nat, ((0, 0), (0, np2 - npix)))
    out = pl.pallas_call(
        functools.partial(_bg_softmax_kernel, n_classes=n_classes,
                          bg_class=bg_class),
        grid=(np2 // tn,),
        in_specs=[pl.BlockSpec(memory_space=pltpu.MemorySpace.SMEM),
                  pl.BlockSpec((c_pad, tn), lambda i: (0, i))],
        out_specs=pl.BlockSpec((c_pad, tn), lambda i: (0, i)),
        out_shape=jax.ShapeDtypeStruct((c_pad, np2), jnp.float32),
        compiler_params=_cparams(("parallel",)),
    )(gmax.reshape(1).astype(jnp.float32), pred_nat)
    return out[:, :npix]


# ----------------------------------------------------------------------------
# Fused 3x3 conv (consumer-side folded BN + LeakyReLU), channels-major
# ----------------------------------------------------------------------------
def conv3x3_raw(x, a_in, c_in, act_in, w, b, *, neg_slope=0.2, tile_n=2048):
    """3x3 'same' conv on (Cin, H, W) -> raw (Cout, H, W) output.

    The producer's folded BatchNorm (a_in, c_in) and LeakyReLU are applied to
    the input while staging it inside the kernel (act_in=False for the first
    layer).  The output is the *raw* conv response (BN/act of this layer are
    applied by its consumer).
    """
    cin, h, wsp = x.shape
    cout = w.shape[-1]
    cout_pad = _ru(cout, 8)
    cin_pad = _ru(cin, 8)
    wp2 = wsp + 2

    a_in = a_in.astype(jnp.float32)
    c_in = c_in.astype(jnp.float32)
    # pad value that the fused scale/shift(+act) maps to exactly 0
    fill = jnp.where(jnp.abs(a_in) > 1e-20, -c_in / a_in, 0.0)
    a_p = jnp.pad(a_in, (0, cin_pad - cin), constant_values=1.0)
    c_p = jnp.pad(c_in, (0, cin_pad - cin))
    fill_p = jnp.pad(fill, (0, cin_pad - cin))

    xpad = jnp.broadcast_to(fill_p[:, None, None], (cin_pad, h + 2, wp2))
    xpad = xpad.at[:cin, 1:h + 1, 1:wsp + 1].set(x.astype(jnp.float32))
    xflat = xpad.reshape(cin_pad, (h + 2) * wp2)

    n_out = h * wp2                       # flat output (incl. 2 wrap columns)
    tn = max(_ru(2 * wp2 + 3, 128), min(tile_n, _ru(n_out, 128)))
    n_out_pad = _ru(n_out, tn)
    lpad = n_out_pad + tn
    xflat = jnp.pad(xflat, ((0, 0), (0, lpad - xflat.shape[1])))

    wk = jnp.pad(w.astype(jnp.float32),
                 ((0, 0), (0, 0), (0, cin_pad - cin), (0, 0)))
    wmat = jnp.transpose(wk, (3, 0, 1, 2)).reshape(cout, 9 * cin_pad)
    wmat = jnp.pad(wmat, ((0, cout_pad - cout), (0, 0))).astype(jnp.bfloat16)
    bvec = jnp.pad(b.astype(jnp.float32),
                   (0, cout_pad - cout)).reshape(cout_pad, 1)

    grid_n = n_out_pad // tn
    y_full = pl.pallas_call(
        functools.partial(_conv_kernel, wp2=wp2, apply_act=bool(act_in),
                          neg_slope=neg_slope),
        grid=(grid_n,),
        in_specs=[pl.BlockSpec((cin_pad, tn), lambda i: (0, i)),
                  pl.BlockSpec((cin_pad, tn), lambda i: (0, i + 1)),
                  pl.BlockSpec((cout_pad, 9 * cin_pad), lambda i: (0, 0)),
                  pl.BlockSpec((cout_pad, 1), lambda i: (0, 0)),
                  pl.BlockSpec((cin_pad, 1), lambda i: (0, 0)),
                  pl.BlockSpec((cin_pad, 1), lambda i: (0, 0))],
        out_specs=pl.BlockSpec((cout_pad, tn), lambda i: (0, i)),
        out_shape=jax.ShapeDtypeStruct((cout_pad, n_out_pad), jnp.float32),
        compiler_params=_cparams(("parallel",)),
    )(xflat, xflat, wmat, bvec,
      a_p.reshape(cin_pad, 1), c_p.reshape(cin_pad, 1))

    # drop garbage wrap columns / padded channels
    return y_full[:cout, :n_out].reshape(cout, h, wp2)[:, :, :wsp]


def channel_stats(y, *, tile_n=2048):
    """Per-channel (sum, sumsq, n) of a raw feature map (C, H, W)."""
    c, h, w = y.shape
    npix = h * w
    yf = y.reshape(c, npix)
    tn = min(tile_n, _ru(npix, 128))
    np2 = _ru(npix, tn)
    if np2 > npix:
        yf = jnp.pad(yf, ((0, 0), (0, np2 - npix)))
    stats = pl.pallas_call(
        functools.partial(_stats_kernel, n_valid=npix),
        grid=(np2 // tn,),
        in_specs=[pl.BlockSpec((c, tn), lambda i: (0, i))],
        out_specs=pl.BlockSpec((c, 128), lambda i: (0, 0)),
        out_shape=jax.ShapeDtypeStruct((c, 128), jnp.float32),
        compiler_params=_cparams(("arbitrary",)),
    )(yf)
    return stats[:, 0], stats[:, 1], npix


def bn_fold(stats, gamma, beta, eps=1e-5):
    """Fold train-mode BatchNorm into a per-channel (a, c) scale/shift."""
    ssum, ssq, n = stats
    mu = ssum / n
    # TODO(synk): E[x^2]-E[x]^2 can cancel for large activations; use a
    # compensated two-pass reduction if bit-parity with PyTorch BN matters.
    var = jnp.maximum(ssq / n - mu * mu, 0.0)
    a = gamma * jax.lax.rsqrt(var + eps)
    c = beta - a * mu
    return a, c


# ----------------------------------------------------------------------------
# Small UNet (channels-major); all conv/BN-stat/softmax compute in Pallas
# ----------------------------------------------------------------------------
def unet_forward(x, p, *, neg_slope=0.2, eps=1e-5):
    # x: (Cin, H, W) raw mean-space input stack
    cin0 = x.shape[0]
    ident_a = jnp.ones((cin0,), jnp.float32)
    ident_c = jnp.zeros((cin0,), jnp.float32)

    y1 = conv3x3_raw(x, ident_a, ident_c, False, p["e1_w"], p["e1_b"])
    a1, c1 = bn_fold(channel_stats(y1), p["e1_g"], p["e1_bt"], eps)

    # stride-2 encoder conv == stride-1 conv + even subsampling of raw output
    y2 = conv3x3_raw(y1, a1, c1, True, p["e2_w"], p["e2_b"])[:, ::2, ::2]
    a2, c2 = bn_fold(channel_stats(y2), p["e2_g"], p["e2_bt"], eps)

    # TODO(synk): fuse the nearest upsample + skip concat into d1's staging.
    up = jnp.repeat(jnp.repeat(y2, 2, axis=1), 2, axis=2)
    cat = jnp.concatenate([up, y1], axis=0)
    a_cat = jnp.concatenate([a2, a1])
    c_cat = jnp.concatenate([c2, c1])
    yd = conv3x3_raw(cat, a_cat, c_cat, True, p["d1_w"], p["d1_b"])
    ad, cd = bn_fold(channel_stats(yd), p["d1_g"], p["d1_bt"], eps)

    # final conv: consumes BN+act of d1, emits raw logits (activation=None)
    return conv3x3_raw(yd, ad, cd, True, p["f_w"], p["f_b"])


def init_params(key, in_channels, enc=(8, 16), dec_feat=8, out_channels=4):
    def conv_init(k, cin, cout):
        kw, kb = jax.random.split(k)
        scale = (2.0 / (9 * cin)) ** 0.5
        w = scale * jax.random.normal(kw, (3, 3, cin, cout), jnp.float32)
        b = 0.01 * jax.random.normal(kb, (cout,), jnp.float32)
        return w, b

    keys = jax.random.split(key, 4)
    p = {}
    p["e1_w"], p["e1_b"] = conv_init(keys[0], in_channels, enc[0])
    p["e1_g"], p["e1_bt"] = jnp.ones((enc[0],)), jnp.zeros((enc[0],))
    p["e2_w"], p["e2_b"] = conv_init(keys[1], enc[0], enc[1])
    p["e2_g"], p["e2_bt"] = jnp.ones((enc[1],)), jnp.zeros((enc[1],))
    p["d1_w"], p["d1_b"] = conv_init(keys[2], enc[1] + enc[0], dec_feat)
    p["d1_g"], p["d1_bt"] = jnp.ones((dec_feat,)), jnp.zeros((dec_feat,))
    p["f_w"], p["f_b"] = conv_init(keys[3], dec_feat, out_channels)
    return p


# ----------------------------------------------------------------------------
# MeanSpaceNet.forward
# ----------------------------------------------------------------------------
def mean_space_net_forward(images, mat_native, ix_ref, params, mean_mat,
                           mean_dim, *, output_classes, implicit, bg_class):
    """images: list of (1, 1, h, w); mat_native: (n_channels, 3, 3)."""
    n_channels = len(images)
    hm, wm = mean_dim

    nix = [x for x in range(n_channels) if x != ix_ref]
    nix.append(ix_ref)                 # reference processed last (grid reused)
    pushed = [None] * n_channels
    counts = [None] * n_channels
    grid_ref = None
    ref_shape = None
    for n in nix:
        h, w = images[n].shape[2:]
        grid = compute_grid(mat_native[n], (h, w), mean_mat)     # (h, w, 2)
        pushed[n], counts[n] = grid_push_count(
            images[n].reshape(h, w).astype(jnp.float32), grid, mean_dim)
        grid_ref, ref_shape = grid, (h, w)

    # mean-space input stack, channels-major (2*n_channels, Hm, Wm)
    inputs = jnp.stack(pushed + counts, axis=0)

    # UNet in mean space
    pred_mean = unet_forward(inputs, params)                     # (Cout, Hm, Wm)
    if implicit and pred_mean.shape[0] > output_classes:
        pred_mean = pred_mean[:output_classes]                   # drop implicit

    # pull back to the reference image's native space (last grid == ix_ref's)
    c_pad = _ru(max(output_classes, 1), 8)
    pred_cm = jnp.pad(pred_mean.reshape(output_classes, hm * wm),
                      ((0, c_pad - output_classes), (0, 0)))
    pred_nat = grid_pull(pred_cm, grid_ref, mean_dim, ref_shape)  # (C_pad, Np)

    h, w = ref_shape
    gmax = jnp.max(pred_nat[:output_classes, :h * w])
    prob = bg_softmax(pred_nat, gmax, output_classes, bg_class)

    # already channels-major == NCHW: (1, output_classes, h, w)
    return prob[:output_classes, :h * w].reshape(1, output_classes, h, w)


# ----------------------------------------------------------------------------
# Demo
# ----------------------------------------------------------------------------
if __name__ == "__main__":
    key = jax.random.PRNGKey(0)
    dim = 2
    mean_dim = (16, 16)
    mean_mat = jnp.eye(dim + 1, dtype=jnp.float32)
    output_classes = 3
    implicit = True          # unet outputs output_classes + 1 channels
    bg_class = 0
    n_channels = 2
    ix_ref = 0

    k_img, k_par = jax.random.split(key)
    img_keys = jax.random.split(k_img, n_channels)
    images = [jax.random.uniform(img_keys[n], (1, 1, 16, 16), jnp.float32)
              for n in range(n_channels)]
    mat_native = jnp.stack([
        jnp.array([[1.0, 0.0, 0.5], [0.0, 1.0, 0.25], [0.0, 0.0, 1.0]],
                  jnp.float32),
        jnp.array([[0.9, 0.0, 0.3], [0.0, 0.95, 0.6], [0.0, 0.0, 1.0]],
                  jnp.float32),
    ])

    params = init_params(k_par, in_channels=2 * n_channels,
                         out_channels=output_classes + 1)

    pred = mean_space_net_forward(
        images, mat_native, ix_ref, params, mean_mat, mean_dim,
        output_classes=output_classes, implicit=implicit, bg_class=bg_class)
    pred = jax.block_until_ready(pred)

    assert pred.shape == (1, output_classes, 16, 16), pred.shape
    assert bool(jnp.all(jnp.isfinite(pred)))
    # probabilities sum to 1 over the channel axis (softmax)
    assert bool(jnp.allclose(jnp.sum(pred, axis=1), 1.0, atol=1e-4))
    print("KERNEL_OK")
</pallas_src>

<mosaic_0001>
module attributes {stable_mosaic.version = 11 : i64} {
  func.func @_push_kernel(%arg0: i32, %arg1: i32, %arg2: memref<512x4xf32, #tpu.memory_space<vmem>>, %arg3: memref<8x32xf32, #tpu.memory_space<vmem>>) attributes {dimension_semantics = [#tpu.dimension_semantics<parallel>, #tpu.dimension_semantics<arbitrary>], iteration_bounds = array<i64: 2, 2>, scalar_prefetch = 0 : i64, scratch_operands = 0 : i64, tpu.core_type = #tpu.core_type<tc>, window_params = [{transform_indices = @transform_0, window_bounds = array<i64: 512, 4>}, {transform_indices = @transform_1, window_bounds = array<i64: 8, 32>}]} {
    %c0_i32 = arith.constant 0 : i32
    %0 = arith.cmpi eq, %arg1, %c0_i32 : i32
    %1 = arith.extui %0 : i1 to i32
    %c0_i32_0 = arith.constant 0 : i32
    %2 = arith.cmpi ne, %1, %c0_i32_0 : i32
    scf.if %2 {
      %cst_9 = arith.constant 0.000000e+00 : f32
      %43 = vector.broadcast %cst_9 : f32 to vector<8x32xf32>
      %c0_10 = arith.constant 0 : index
      %c0_11 = arith.constant 0 : index
      %44 = vector.load %arg3[%c0_10, %c0_11] : memref<8x32xf32, #tpu.memory_space<vmem>>, vector<8x32xf32>
      tpu.vector_store %arg3[%c0_10, %c0_11], %43 {strides = array<i32>} : memref<8x32xf32, #tpu.memory_space<vmem>>, vector<8x32xf32>,
    } else {
    }
    %c0 = arith.constant 0 : index
    %c0_1 = arith.constant 0 : index
    %3 = vector.load %arg2[%c0, %c0_1] : memref<512x4xf32, #tpu.memory_space<vmem>>, vector<512x4xf32>
    %4 = vector.extract_strided_slice %3 {offsets = [0, 0], sizes = [512, 1], strides = [1, 1]} : vector<512x4xf32> to vector<512x1xf32>
    %5 = vector.extract_strided_slice %3 {offsets = [0, 1], sizes = [512, 1], strides = [1, 1]} : vector<512x4xf32> to vector<512x1xf32>
    %6 = vector.extract_strided_slice %3 {offsets = [0, 2], sizes = [512, 1], strides = [1, 1]} : vector<512x4xf32> to vector<512x1xf32>
    %7 = vector.extract_strided_slice %3 {offsets = [0, 3], sizes = [512, 1], strides = [1, 1]} : vector<512x4xf32> to vector<512x1xf32>
    %8 = tpu.iota {dimensions = array<i32: 1>} : vector<512x8xi32>
    %c8_i32 = arith.constant 8 : i32
    %9 = arith.muli %arg0, %c8_i32 : i32
    %10 = vector.broadcast %9 : i32 to vector<512x8xi32>
    %11 = arith.addi %8, %10 : vector<512x8xi32>
    %12 = arith.sitofp %11 : vector<512x8xi32> to vector<512x8xf32>
    %13 = vector.broadcast %4 : vector<512x1xf32> to vector<512x8xf32>
    %14 = arith.cmpf oeq, %12, %13 : vector<512x8xf32>
    %15 = arith.extui %14 : vector<512x8xi1> to vector<512x8xi32>
    %16 = arith.sitofp %15 : vector<512x8xi32> to vector<512x8xf32>
    %17 = arith.truncf %16 : vector<512x8xf32> to vector<512x8xbf16>
    %18 = tpu.iota {dimensions = array<i32: 1>} : vector<512x32xi32>
    %c16_i32 = arith.constant 16 : i32
    %19 = vector.broadcast %c16_i32 : i32 to vector<512x32xi32>
    %20 = arith.cmpi slt, %18, %19 : vector<512x32xi32>
    %c16_i32_2 = arith.constant 16 : i32
    %21 = vector.broadcast %c16_i32_2 : i32 to vector<512x32xi32>
    %22 = arith.subi %18, %21 : vector<512x32xi32>
    %23 = arith.select %20, %18, %22 : vector<512x32xi1>, vector<512x32xi32>
    %24 = arith.sitofp %23 : vector<512x32xi32> to vector<512x32xf32>
    %c16_i32_3 = arith.constant 16 : i32
    %25 = vector.broadcast %c16_i32_3 : i32 to vector<512x32xi32>
    %26 = arith.cmpi slt, %18, %25 : vector<512x32xi32>
    %cst = arith.constant 1.000000e+00 : f32
    %27 = vector.shape_cast %7 : vector<512x1xf32> to vector<512x1xf32>
    %28 = vector.broadcast %27 : vector<512x1xf32> to vector<512x32xf32>
    %29 = vector.broadcast %cst : f32 to vector<512x32xf32>
    %30 = arith.select %26, %28, %29 : vector<512x32xi1>, vector<512x32xf32>
    %31 = vector.broadcast %5 : vector<512x1xf32> to vector<512x32xf32>
    %32 = arith.cmpf oeq, %24, %31 : vector<512x32xf32>
    %33 = arith.extui %32 : vector<512x32xi1> to vector<512x32xi32>
    %34 = arith.sitofp %33 : vector<512x32xi32> to vector<512x32xf32>
    %35 = vector.broadcast %6 : vector<512x1xf32> to vector<512x32xf32>
    %36 = arith.mulf %34, %35 : vector<512x32xf32>
    %37 = arith.mulf %36, %30 : vector<512x32xf32>
    %38 = arith.truncf %37 : vector<512x32xf32> to vector<512x32xbf16>
    %c0_4 = arith.constant 0 : index
    %c0_5 = arith.constant 0 : index
    %39 = vector.load %arg3[%c0_4, %c0_5] : memref<8x32xf32, #tpu.memory_space<vmem>>, vector<8x32xf32>
    %cst_6 = arith.constant dense<0.000000e+00> : vector<8x32xf32>
    %40 = tpu.matmul %17, %38, %cst_6 {dimension_numbers = #tpu.dot_dimension_numbers<[0], [0], [1], [1], [0, 1, 1, 1], [], []>} : vector<512x8xbf16>, vector<512x32xbf16>, vector<8x32xf32> -> vector<8x32xf32>
    %41 = arith.addf %39, %40 : vector<8x32xf32>
    %c0_7 = arith.constant 0 : index
    %c0_8 = arith.constant 0 : index
    %42 = vector.load %arg3[%c0_7, %c0_8] : memref<8x32xf32, #tpu.memory_space<vmem>>, vector<8x32xf32>
    tpu.vector_store %arg3[%c0_7, %c0_8], %41 {strides = array<i32>} : memref<8x32xf32, #tpu.memory_space<vmem>>, vector<8x32xf32>,
    return
  }
  func.func @transform_0(%arg0: i32, %arg1: i32) -> (i32, i32) {
    %c2_i32 = arith.constant 2 : i32
    %0 = arith.muli %arg0, %c2_i32 : i32
    %1 = arith.addi %0, %arg1 : i32
    %c0_i32 = arith.constant 0 : i32
    %c0_i32_0 = arith.constant 0 : i32
    return %1, %c0_i32 : i32, i32
  }
  func.func @transform_1(%arg0: i32, %arg1: i32) -> (i32, i32) {
    %c0_i32 = arith.constant 0 : i32
    %c0_i32_0 = arith.constant 0 : i32
    return %arg0, %c0_i32 : i32, i32
  }
}

</mosaic_0001>

<llo_original>
// kernel: tpu_custom_call.1
$region0: #{tpu_custom_call.1}
  #allocation0 [shape = 'u32[]', space=smem, size = 0x4, offset = 0x4, fixed_abs, tag = 'smem constant byte address 0x4 - core index']
  #allocation1 [shape = 'u32[144,128]{1,0:T(1,128)}', space=vmem, size = 0x12000, scoped, tag = 'internal scratch']
  %s0 = inlined_call_operand.vmem [shape: f32[2048,4], index: 0, kind: input, shape index: {}]
  %s1 = inlined_call_operand.hbm [shape: f32[16,32], index: 1, kind: output, shape index: {}]
  %s2 = sld [smem:[#allocation0]]
  $region41: #{tpu_custom_call.1} parent=0
    _
  %s4 = ssub.s32 1, %s2
  %s5 = scalar_select 0, %s4, %s2
  $region1: #{tpu_custom_call.1} parent=0
    #allocation2 [shape = 'u8[8192]{0}', space=vmem, size = 0x2000, scoped, tag = 'output window, operand 0']
    #allocation3 [shape = 's32[2]{0}', space=sflag, size = 0x8, scoped, tag = 'scoped memory for tpu_custom_call.1']
    %6 = vsyncpa [#allocation3], 0
    %s7 = scalar_lea.sflag [#allocation3], 1
    %8 = vsyncpa %s7, 0
    loop: start=0, step=1, limit=6
    $region2: #{tpu_custom_call.1} parent=1 // loop_pre_header
      _
    $region3: #{tpu_custom_call.1} parent=1 // loop_header
      %s10 = sphi 0, %s14
      %p11 = scmp.ge.s32.totalorder %s10, 6
      %s17 = sphi 0, %s29
      %s18 = sphi 0, %s25
      %s19 = sphi 0, %s17
      %s20 = sphi 0, %s18
      %s21 = sphi 0, %s19
      %s22 = sphi 0, %s20
      %s36 = sphi 0, %s38
      %s39 = sphi 0, %s36
      %s40 = sphi 0, %s39
      %s56 = sphi 0, %s40
      %s62 = sphi 0, %s64
      %s65 = sphi 0, %s62
      %s66 = sphi 0, %s65
      %s82 = sphi 0, %s66
    $region4: #{tpu_custom_call.1} parent=1 // loop_header_branch
      %13 = sbr.rel (%p11) target = $region8
    $region5: #{tpu_custom_call.1} parent=1 // loop_body
      %s15 = ssub.s32 %s10, 1
      %s16 = ssub.s32 %s10, 2
      %s23 = sadd.s32 1, %s18
      %p24 = scmp.ge.s32.totalorder %s23, 2
      %s25 = scalar_select %p24, 0, %s23
      %s26 = sadd.s32 1, %s17
      %s27 = scalar_select %p24, %s26, %s17
      %p28 = scmp.ge.s32.totalorder %s27, 2
      %s29 = scalar_select %p28, 0, %s27
      %s30 = smul.u32 %s17, 2
      %s31 = sadd.s32 %s30, %s18
      %s32 = smul.u32 %s29, 2
      %s33 = sadd.s32 %s32, %s25
      %s34 = ssub.s32 %s31, %s33
      %p35 = scmp.eq.s32.totalorder %s34, 0
      %s37 = sadd.s32 %s36, 1
      %s38 = scalar_select %p35, %s36, %s37
      %p41 = pneg %p35
      %p42 = scmp.eq.s32.totalorder %s10, 3
      %p43 = por %p41, %p42
      %p44 = scmp.ne.s32.totalorder %s36, %s39
      %p45 = scmp.eq.s32.totalorder %s10, 0
      %p46 = por %p44, %p45
      %p47 = scmp.ne.s32.totalorder %s36, %s39
      %p48 = scmp.eq.s32.totalorder %s15, 3
      %p49 = por %p47, %p48
      %p50 = scmp.ne.s32.totalorder %s39, %s40
      %p51 = scmp.eq.s32.totalorder %s15, 0
      %p52 = por %p50, %p51
      %p53 = scmp.ne.s32.totalorder %s39, %s40
      %p54 = scmp.eq.s32.totalorder %s16, 3
      %p55 = por %p53, %p54
      %p57 = scmp.ne.s32.totalorder %s40, %s56
      %p58 = scmp.eq.s32.totalorder %s16, 0
      %p59 = por %p57, %p58
      %s60 = ssub.s32 %s17, %s29
      %p61 = scmp.eq.s32.totalorder %s60, 0
      %s63 = sadd.s32 %s62, 1
      %s64 = scalar_select %p61, %s62, %s63
      %p67 = pneg %p61
      %p68 = scmp.eq.s32.totalorder %s10, 3
      %p69 = por %p67, %p68
      %p70 = scmp.ne.s32.totalorder %s62, %s65
      %p71 = scmp.eq.s32.totalorder %s10, 0
      %p72 = por %p70, %p71
      %p73 = scmp.ne.s32.totalorder %s62, %s65
      %p74 = scmp.eq.s32.totalorder %s15, 3
      %p75 = por %p73, %p74
      %p76 = scmp.ne.s32.totalorder %s65, %s66
      %p77 = scmp.eq.s32.totalorder %s15, 0
      %p78 = por %p76, %p77
      %p79 = scmp.ne.s32.totalorder %s65, %s66
      %p80 = scmp.eq.s32.totalorder %s16, 3
      %p81 = por %p79, %p80
      %p83 = scmp.ne.s32.totalorder %s66, %s82
      %p84 = scmp.eq.s32.totalorder %s16, 0
      %p85 = por %p83, %p84
      %p86 = scmp.le.s32.totalorder 1, %s10
      %p87 = scmp.lt.s32.totalorder %s10, 5
      %p88 = pnand %p86, %p87
      %p89 = pneg %p88
      // Predicated region
      $region9: #{tpu_custom_call.1} parent=5 // pred_check
        _
      $region10: #{tpu_custom_call.1} parent=5 // pred_check_branch
        %91 = sbr.rel (%p88) target = $region12
      $region11: #{tpu_custom_call.1} parent=5 // pred_region
        %s92 = ssub.s32 %s10, 1
      $region12: #{tpu_custom_call.1} parent=5 // pred_fallthru
        _
      %p93 = scmp.lt.s32.totalorder %s10, 4
      // Predicated region
      $region13: #{tpu_custom_call.1} parent=5 // pred_check
        %p94 = pneg %p93
      $region14: #{tpu_custom_call.1} parent=5 // pred_check_branch
        %96 = sbr.rel (%p94) target = $region16
      $region15: #{tpu_custom_call.1} parent=5 // pred_region
        // Predicated region
        $region17: #{tpu_custom_call.1} parent=15 // pred_check
          %p97 = pneg %p46
        $region18: #{tpu_custom_call.1} parent=15 // pred_check_branch
          %99 = sbr.rel (%p97) target = $region20
        $region19: #{tpu_custom_call.1} parent=15 // pred_region
          %s100 = smul.u32 %s17, 2
          %s101 = sadd.s32 %s100, %s18
          %s102 = smul.u32 64, %s101
          %p103 = scmp.lt.s32.totalorder %s102, 255
          %s104 = scalar_select %p103, %s102, 255
          %s105 = smul.addr %s104, 8
          %s106 = scalar_lea.vmem %s0, %s105
          %s107 = smul.u32 %s17, 2
          %s108 = sadd.s32 %s107, %s18
          %s109 = smul.u32 64, %s108
        $region20: #{tpu_custom_call.1} parent=15 // pred_fallthru
          _
      $region16: #{tpu_custom_call.1} parent=5 // pred_fallthru
        _
      %p110 = scmp.le.s32.totalorder 1, %s10
      %p111 = scmp.lt.s32.totalorder %s10, 5
      %p112 = pnand %p110, %p111
      %p113 = pneg %p112
      // Predicated region
      $region21: #{tpu_custom_call.1} parent=5 // pred_check
        _
      $region22: #{tpu_custom_call.1} parent=5 // pred_check_branch
        %115 = sbr.rel (%p112) target = $region24
      $region23: #{tpu_custom_call.1} parent=5 // pred_region
        %s116 = ssub.s32 %s10, 1
        %s117 = smul.u32 %s19, 2
        %s118 = sadd.s32 %s117, %s20
        %s119 = smul.u32 64, %s118
        %p120 = scmp.lt.s32.totalorder %s119, 255
        %s121 = scalar_select %p120, %s119, 255
        %s122 = smul.addr %s121, 8
        %s123 = scalar_lea.vmem %s0, %s122
        %p124 = pneg %p52
        %p125 = pneg %p49
        %p126 = pneg %p78
        %p127 = pneg %p75
        %s128 = sand.u32 %s65, 1
        %s129 = scalar_lea.sflag [#allocation3], %s128
        %s130 = sand.u32 %s65, 1
        %s131 = smul.addr %s130, 8
        %s132 = scalar_lea.vmem [#allocation2], %s131
        %s133 = smul.u32 %s19, 2
        %s134 = sadd.s32 %s133, %s20
        %s135 = smul.u32 64, %s134
        %p136 = scmp.lt.s32.totalorder %s135, 255
        %s137 = scalar_select %p136, %s135, 255
        %s138 = smul.addr %s137, 8
        %s139 = scalar_lea.vmem %s0, %s138
        %s140 = smul.u32 %s19, 2
        %s141 = sadd.s32 %s140, %s20
        %s142 = smul.u32 64, %s141
        %p144 = scmp.eq.s32.totalorder %s20, 0
        // Predicated region
        $region25: #{tpu_custom_call.1} parent=23 // pred_check
          %p145 = pneg %p144
        $region26: #{tpu_custom_call.1} parent=23 // pred_check_branch
          %147 = sbr.rel (%p145) target = $region28
        $region27: #{tpu_custom_call.1} parent=23 // pred_region
          %vm148 = vcmask 261120
          %149 = vst.msk [vmem:[%s132] sm:$0xff] %vm148, 0.0
        $region28: #{tpu_custom_call.1} parent=23 // pred_fallthru
          _
        %v150 = vld [vmem:[%s139] sm:$0xff]
        %v151 = vld [vmem:[%s139 + $0x8] sm:$0xff]
        %v152 = vld [vmem:[%s139 + $0x10] sm:$0xff]
        %v153 = vld [vmem:[%s139 + $0x18] sm:$0xff]
        %v154 = vld [vmem:[%s139 + $0x20] sm:$0xff]
        %v155 = vld [vmem:[%s139 + $0x28] sm:$0xff]
        %v156 = vld [vmem:[%s139 + $0x30] sm:$0xff]
        %v157 = vld [vmem:[%s139 + $0x38] sm:$0xff]
        %v158 = vld [vmem:[%s139 + $0x40] sm:$0xff]
        %v159 = vld [vmem:[%s139 + $0x48] sm:$0xff]
        %v160 = vld [vmem:[%s139 + $0x50] sm:$0xff]
        %v161 = vld [vmem:[%s139 + $0x58] sm:$0xff]
        %v162 = vld [vmem:[%s139 + $0x60] sm:$0xff]
        %v163 = vld [vmem:[%s139 + $0x68] sm:$0xff]
        %v164 = vld [vmem:[%s139 + $0x70] sm:$0xff]
        %v165 = vld [vmem:[%s139 + $0x78] sm:$0xff]
        %v166 = vld [vmem:[%s139 + $0x80] sm:$0xff]
        %v167 = vld [vmem:[%s139 + $0x88] sm:$0xff]
        %v168 = vld [vmem:[%s139 + $0x90] sm:$0xff]
        %v169 = vld [vmem:[%s139 + $0x98] sm:$0xff]
        %v170 = vld [vmem:[%s139 + $0xa0] sm:$0xff]
        %v171 = vld [vmem:[%s139 + $0xa8] sm:$0xff]
        %v172 = vld [vmem:[%s139 + $0xb0] sm:$0xff]
        %v173 = vld [vmem:[%s139 + $0xb8] sm:$0xff]
        %v174 = vld [vmem:[%s139 + $0xc0] sm:$0xff]
        %v175 = vld [vmem:[%s139 + $0xc8] sm:$0xff]
        %v176 = vld [vmem:[%s139 + $0xd0] sm:$0xff]
        %v177 = vld [vmem:[%s139 + $0xd8] sm:$0xff]
        %v178 = vld [vmem:[%s139 + $0xe0] sm:$0xff]
        %v179 = vld [vmem:[%s139 + $0xe8] sm:$0xff]
        %v180 = vld [vmem:[%s139 + $0xf0] sm:$0xff]
        %v181 = vld [vmem:[%s139 + $0xf8] sm:$0xff]
        %v182 = vld [vmem:[%s139 + $0x100] sm:$0xff]
        %v183 = vld [vmem:[%s139 + $0x108] sm:$0xff]
        %v184 = vld [vmem:[%s139 + $0x110] sm:$0xff]
        %v185 = vld [vmem:[%s139 + $0x118] sm:$0xff]
        %v186 = vld [vmem:[%s139 + $0x120] sm:$0xff]
        %v187 = vld [vmem:[%s139 + $0x128] sm:$0xff]
        %v188 = vld [vmem:[%s139 + $0x130] sm:$0xff]
        %v189 = vld [vmem:[%s139 + $0x138] sm:$0xff]
        %v190 = vld [vmem:[%s139 + $0x140] sm:$0xff]
        %v191 = vld [vmem:[%s139 + $0x148] sm:$0xff]
        %v192 = vld [vmem:[%s139 + $0x150] sm:$0xff]
        %v193 = vld [vmem:[%s139 + $0x158] sm:$0xff]
        %v194 = vld [vmem:[%s139 + $0x160] sm:$0xff]
        %v195 = vld [vmem:[%s139 + $0x168] sm:$0xff]
        %v196 = vld [vmem:[%s139 + $0x170] sm:$0xff]
        %v197 = vld [vmem:[%s139 + $0x178] sm:$0xff]
        %v198 = vld [vmem:[%s139 + $0x180] sm:$0xff]
        %v199 = vld [vmem:[%s139 + $0x188] sm:$0xff]
        %v200 = vld [vmem:[%s139 + $0x190] sm:$0xff]
        %v201 = vld [vmem:[%s139 + $0x198] sm:$0xff]
        %v202 = vld [vmem:[%s139 + $0x1a0] sm:$0xff]
        %v203 = vld [vmem:[%s139 + $0x1a8] sm:$0xff]
        %v204 = vld [vmem:[%s139 + $0x1b0] sm:$0xff]
        %v205 = vld [vmem:[%s139 + $0x1b8] sm:$0xff]
        %v206 = vld [vmem:[%s139 + $0x1c0] sm:$0xff]
        %v207 = vld [vmem:[%s139 + $0x1c8] sm:$0xff]
        %v208 = vld [vmem:[%s139 + $0x1d0] sm:$0xff]
        %v209 = vld [vmem:[%s139 + $0x1d8] sm:$0xff]
        %v210 = vld [vmem:[%s139 + $0x1e0] sm:$0xff]
        %v211 = vld [vmem:[%s139 + $0x1e8] sm:$0xff]
        %v212 = vld [vmem:[%s139 + $0x1f0] sm:$0xff]
        %v213 = vld [vmem:[%s139 + $0x1f8] sm:$0xff]
        %v214 = vlaneseq
        %v215 = vand.u32 %v214, 127
        %s216 = smul.u32 %s19, 8
        %v217 = vstv %s216
        %v218 = vadd.s32 %v215, %v217
        %v219 = vcvt.s32.f32 %v218
        %221 = vset.pattern.permute.xlu0 0
        %222 = vperm.xlu0 %221, %v150
        %v223 = vpop.permute.xlu0 %222
        %226 = vset.pattern.permute.xlu0 0
        %227 = vperm.xlu0 %226, %v151
        %v228 = vpop.permute.xlu0 %227
        %231 = vset.pattern.permute.xlu0 0
        %232 = vperm.xlu0 %231, %v152
        %v233 = vpop.permute.xlu0 %232
        %236 = vset.pattern.permute.xlu0 0
        %237 = vperm.xlu0 %236, %v153
        %v238 = vpop.permute.xlu0 %237
        %241 = vset.pattern.permute.xlu0 0
        %242 = vperm.xlu0 %241, %v154
        %v243 = vpop.permute.xlu0 %242
        %246 = vset.pattern.permute.xlu0 0
        %247 = vperm.xlu0 %246, %v155
        %v248 = vpop.permute.xlu0 %247
        %251 = vset.pattern.permute.xlu0 0
        %252 = vperm.xlu0 %251, %v156
        %v253 = vpop.permute.xlu0 %252
        %256 = vset.pattern.permute.xlu0 0
        %257 = vperm.xlu0 %256, %v157
        %v258 = vpop.permute.xlu0 %257
        %261 = vset.pattern.permute.xlu0 0
        %262 = vperm.xlu0 %261, %v158
        %v263 = vpop.permute.xlu0 %262
        %266 = vset.pattern.permute.xlu0 0
        %267 = vperm.xlu0 %266, %v159
        %v268 = vpop.permute.xlu0 %267
        %271 = vset.pattern.permute.xlu0 0
        %272 = vperm.xlu0 %271, %v160
        %v273 = vpop.permute.xlu0 %272
        %276 = vset.pattern.permute.xlu0 0
        %277 = vperm.xlu0 %276, %v161
        %v278 = vpop.permute.xlu0 %277
        %281 = vset.pattern.permute.xlu0 0
        %282 = vperm.xlu0 %281, %v162
        %v283 = vpop.permute.xlu0 %282
        %286 = vset.pattern.permute.xlu0 0
        %287 = vperm.xlu0 %286, %v163
        %v288 = vpop.permute.xlu0 %287
        %291 = vset.pattern.permute.xlu0 0
        %292 = vperm.xlu0 %291, %v164
        %v293 = vpop.permute.xlu0 %292
        %296 = vset.pattern.permute.xlu0 0
        %297 = vperm.xlu0 %296, %v165
        %v298 = vpop.permute.xlu0 %297
        %301 = vset.pattern.permute.xlu0 0
        %302 = vperm.xlu0 %301, %v166
        %v303 = vpop.permute.xlu0 %302
        %306 = vset.pattern.permute.xlu0 0
        %307 = vperm.xlu0 %306, %v167
        %v308 = vpop.permute.xlu0 %307
        %311 = vset.pattern.permute.xlu0 0
        %312 = vperm.xlu0 %311, %v168
        %v313 = vpop.permute.xlu0 %312
        %316 = vset.pattern.permute.xlu0 0
        %317 = vperm.xlu0 %316, %v169
        %v318 = vpop.permute.xlu0 %317
        %321 = vset.pattern.permute.xlu0 0
        %322 = vperm.xlu0 %321, %v170
        %v323 = vpop.permute.xlu0 %322
        %326 = vset.pattern.permute.xlu0 0
        %327 = vperm.xlu0 %326, %v171
        %v328 = vpop.permute.xlu0 %327
        %331 = vset.pattern.permute.xlu0 0
        %332 = vperm.xlu0 %331, %v172
        %v333 = vpop.permute.xlu0 %332
        %336 = vset.pattern.permute.xlu0 0
        %337 = vperm.xlu0 %336, %v173
        %v338 = vpop.permute.xlu0 %337
        %341 = vset.pattern.permute.xlu0 0
        %342 = vperm.xlu0 %341, %v174
        %v343 = vpop.permute.xlu0 %342
        %346 = vset.pattern.permute.xlu0 0
        %347 = vperm.xlu0 %346, %v175
        %v348 = vpop.permute.xlu0 %347
        %351 = vset.pattern.permute.xlu0 0
        %352 = vperm.xlu0 %351, %v176
        %v353 = vpop.permute.xlu0 %352
        %356 = vset.pattern.permute.xlu0 0
        %357 = vperm.xlu0 %356, %v177
        %v358 = vpop.permute.xlu0 %357
        %361 = vset.pattern.permute.xlu0 0
        %362 = vperm.xlu0 %361, %v178
        %v363 = vpop.permute.xlu0 %362
        %366 = vset.pattern.permute.xlu0 0
        %367 = vperm.xlu0 %366, %v179
        %v368 = vpop.permute.xlu0 %367
        %371 = vset.pattern.permute.xlu0 0
        %372 = vperm.xlu0 %371, %v180
        %v373 = vpop.permute.xlu0 %372
        %376 = vset.pattern.permute.xlu0 0
        %377 = vperm.xlu0 %376, %v181
        %v378 = vpop.permute.xlu0 %377
        %381 = vset.pattern.permute.xlu0 0
        %382 = vperm.xlu0 %381, %v182
        %v383 = vpop.permute.xlu0 %382
        %386 = vset.pattern.permute.xlu0 0
        %387 = vperm.xlu0 %386, %v183
        %v388 = vpop.permute.xlu0 %387
        %391 = vset.pattern.permute.xlu0 0
        %392 = vperm.xlu0 %391, %v184
        %v393 = vpop.permute.xlu0 %392
        %396 = vset.pattern.permute.xlu0 0
        %397 = vperm.xlu0 %396, %v185
        %v398 = vpop.permute.xlu0 %397
        %401 = vset.pattern.permute.xlu0 0
        %402 = vperm.xlu0 %401, %v186
        %v403 = vpop.permute.xlu0 %402
        %406 = vset.pattern.permute.xlu0 0
        %407 = vperm.xlu0 %406, %v187
        %v408 = vpop.permute.xlu0 %407
        %411 = vset.pattern.permute.xlu0 0
        %412 = vperm.xlu0 %411, %v188
        %v413 = vpop.permute.xlu0 %412
        %416 = vset.pattern.permute.xlu0 0
        %417 = vperm.xlu0 %416, %v189
        %v418 = vpop.permute.xlu0 %417
        %421 = vset.pattern.permute.xlu0 0
        %422 = vperm.xlu0 %421, %v190
        %v423 = vpop.permute.xlu0 %422
        %426 = vset.pattern.permute.xlu0 0
        %427 = vperm.xlu0 %426, %v191
        %v428 = vpop.permute.xlu0 %427
        %431 = vset.pattern.permute.xlu0 0
        %432 = vperm.xlu0 %431, %v192
        %v433 = vpop.permute.xlu0 %432
        %436 = vset.pattern.permute.xlu0 0
        %437 = vperm.xlu0 %436, %v193
        %v438 = vpop.permute.xlu0 %437
        %441 = vset.pattern.permute.xlu0 0
        %442 = vperm.xlu0 %441, %v194
        %v443 = vpop.permute.xlu0 %442
        %446 = vset.pattern.permute.xlu0 0
        %447 = vperm.xlu0 %446, %v195
        %v448 = vpop.permute.xlu0 %447
        %451 = vset.pattern.permute.xlu0 0
        %452 = vperm.xlu0 %451, %v196
        %v453 = vpop.permute.xlu0 %452
        %456 = vset.pattern.permute.xlu0 0
        %457 = vperm.xlu0 %456, %v197
        %v458 = vpop.permute.xlu0 %457
        %461 = vset.pattern.permute.xlu0 0
        %462 = vperm.xlu0 %461, %v198
        %v463 = vpop.permute.xlu0 %462
        %466 = vset.pattern.permute.xlu0 0
        %467 = vperm.xlu0 %466, %v199
        %v468 = vpop.permute.xlu0 %467
        %471 = vset.pattern.permute.xlu0 0
        %472 = vperm.xlu0 %471, %v200
        %v473 = vpop.permute.xlu0 %472
        %476 = vset.pattern.permute.xlu0 0
        %477 = vperm.xlu0 %476, %v201
        %v478 = vpop.permute.xlu0 %477
        %481 = vset.pattern.permute.xlu0 0
        %482 = vperm.xlu0 %481, %v202
        %v483 = vpop.permute.xlu0 %482
        %486 = vset.pattern.permute.xlu0 0
        %487 = vperm.xlu0 %486, %v203
        %v488 = vpop.permute.xlu0 %487
        %491 = vset.pattern.permute.xlu0 0
        %492 = vperm.xlu0 %491, %v204
        %v493 = vpop.permute.xlu0 %492
        %496 = vset.pattern.permute.xlu0 0
        %497 = vperm.xlu0 %496, %v205
        %v498 = vpop.permute.xlu0 %497
        %501 = vset.pattern.permute.xlu0 0
        %502 = vperm.xlu0 %501, %v206
        %v503 = vpop.permute.xlu0 %502
        %506 = vset.pattern.permute.xlu0 0
        %507 = vperm.xlu0 %506, %v207
        %v508 = vpop.permute.xlu0 %507
        %511 = vset.pattern.permute.xlu0 0
        %512 = vperm.xlu0 %511, %v208
        %v513 = vpop.permute.xlu0 %512
        %516 = vset.pattern.permute.xlu0 0
        %517 = vperm.xlu0 %516, %v209
        %v518 = vpop.permute.xlu0 %517
        %521 = vset.pattern.permute.xlu0 0
        %522 = vperm.xlu0 %521, %v210
        %v523 = vpop.permute.xlu0 %522
        %526 = vset.pattern.permute.xlu0 0
        %527 = vperm.xlu0 %526, %v211
        %v528 = vpop.permute.xlu0 %527
        %531 = vset.pattern.permute.xlu0 0
        %532 = vperm.xlu0 %531, %v212
        %v533 = vpop.permute.xlu0 %532
        %536 = vset.pattern.permute.xlu0 0
        %537 = vperm.xlu0 %536, %v213
        %v538 = vpop.permute.xlu0 %537
        %vm540 = vcmp.eq.f32.partialorder %v219, %v223
        %vm541 = vcmp.eq.f32.partialorder %v219, %v228
        %vm542 = vcmp.eq.f32.partialorder %v219, %v233
        %vm543 = vcmp.eq.f32.partialorder %v219, %v238
        %vm544 = vcmp.eq.f32.partialorder %v219, %v243
        %vm545 = vcmp.eq.f32.partialorder %v219, %v248
        %vm546 = vcmp.eq.f32.partialorder %v219, %v253
        %vm547 = vcmp.eq.f32.partialorder %v219, %v258
        %vm548 = vcmp.eq.f32.partialorder %v219, %v263
        %vm549 = vcmp.eq.f32.partialorder %v219, %v268
        %vm550 = vcmp.eq.f32.partialorder %v219, %v273
        %vm551 = vcmp.eq.f32.partialorder %v219, %v278
        %vm552 = vcmp.eq.f32.partialorder %v219, %v283
        %vm553 = vcmp.eq.f32.partialorder %v219, %v288
        %vm554 = vcmp.eq.f32.partialorder %v219, %v293
        %vm555 = vcmp.eq.f32.partialorder %v219, %v298
        %vm556 = vcmp.eq.f32.partialorder %v219, %v303
        %vm557 = vcmp.eq.f32.partialorder %v219, %v308
        %vm558 = vcmp.eq.f32.partialorder %v219, %v313
        %vm559 = vcmp.eq.f32.partialorder %v219, %v318
        %vm560 = vcmp.eq.f32.partialorder %v219, %v323
        %vm561 = vcmp.eq.f32.partialorder %v219, %v328
        %vm562 = vcmp.eq.f32.partialorder %v219, %v333
        %vm563 = vcmp.eq.f32.partialorder %v219, %v338
        %vm564 = vcmp.eq.f32.partialorder %v219, %v343
        %vm565 = vcmp.eq.f32.partialorder %v219, %v348
        %vm566 = vcmp.eq.f32.partialorder %v219, %v353
        %vm567 = vcmp.eq.f32.partialorder %v219, %v358
        %vm568 = vcmp.eq.f32.partialorder %v219, %v363
        %vm569 = vcmp.eq.f32.partialorder %v219, %v368
        %vm570 = vcmp.eq.f32.partialorder %v219, %v373
        %vm571 = vcmp.eq.f32.partialorder %v219, %v378
        %vm572 = vcmp.eq.f32.partialorder %v219, %v383
        %vm573 = vcmp.eq.f32.partialorder %v219, %v388
        %vm574 = vcmp.eq.f32.partialorder %v219, %v393
        %vm575 = vcmp.eq.f32.partialorder %v219, %v398
        %vm576 = vcmp.eq.f32.partialorder %v219, %v403
        %vm577 = vcmp.eq.f32.partialorder %v219, %v408
        %vm578 = vcmp.eq.f32.partialorder %v219, %v413
        %vm579 = vcmp.eq.f32.partialorder %v219, %v418
        %vm580 = vcmp.eq.f32.partialorder %v219, %v423
        %vm581 = vcmp.eq.f32.partialorder %v219, %v428
        %vm582 = vcmp.eq.f32.partialorder %v219, %v433
        %vm583 = vcmp.eq.f32.partialorder %v219, %v438
        %vm584 = vcmp.eq.f32.partialorder %v219, %v443
        %vm585 = vcmp.eq.f32.partialorder %v219, %v448
        %vm586 = vcmp.eq.f32.partialorder %v219, %v453
        %vm587 = vcmp.eq.f32.partialorder %v219, %v458
        %vm588 = vcmp.eq.f32.partialorder %v219, %v463
        %vm589 = vcmp.eq.f32.partialorder %v219, %v468
        %vm590 = vcmp.eq.f32.partialorder %v219, %v473
        %vm591 = vcmp.eq.f32.partialorder %v219, %v478
        %vm592 = vcmp.eq.f32.partialorder %v219, %v483
        %vm593 = vcmp.eq.f32.partialorder %v219, %v488
        %vm594 = vcmp.eq.f32.partialorder %v219, %v493
        %vm595 = vcmp.eq.f32.partialorder %v219, %v498
        %vm596 = vcmp.eq.f32.partialorder %v219, %v503
        %vm597 = vcmp.eq.f32.partialorder %v219, %v508
        %vm598 = vcmp.eq.f32.partialorder %v219, %v513
        %vm599 = vcmp.eq.f32.partialorder %v219, %v518
        %vm600 = vcmp.eq.f32.partialorder %v219, %v523
        %vm601 = vcmp.eq.f32.partialorder %v219, %v528
        %vm602 = vcmp.eq.f32.partialorder %v219, %v533
        %vm603 = vcmp.eq.f32.partialorder %v219, %v538
        %v604 = vsel %vm540, 1, 0
        %v605 = vsel %vm541, 1, 0
        %v606 = vsel %vm542, 1, 0
        %v607 = vsel %vm543, 1, 0
        %v608 = vsel %vm544, 1, 0
        %v609 = vsel %vm545, 1, 0
        %v610 = vsel %vm546, 1, 0
        %v611 = vsel %vm547, 1, 0
        %v612 = vsel %vm548, 1, 0
        %v613 = vsel %vm549, 1, 0
        %v614 = vsel %vm550, 1, 0
        %v615 = vsel %vm551, 1, 0
        %v616 = vsel %vm552, 1, 0
        %v617 = vsel %vm553, 1, 0
        %v618 = vsel %vm554, 1, 0
        %v619 = vsel %vm555, 1, 0
        %v620 = vsel %vm556, 1, 0
        %v621 = vsel %vm557, 1, 0
        %v622 = vsel %vm558, 1, 0
        %v623 = vsel %vm559, 1, 0
        %v624 = vsel %vm560, 1, 0
        %v625 = vsel %vm561, 1, 0
        %v626 = vsel %vm562, 1, 0
        %v627 = vsel %vm563, 1, 0
        %v628 = vsel %vm564, 1, 0
        %v629 = vsel %vm565, 1, 0
        %v630 = vsel %vm566, 1, 0
        %v631 = vsel %vm567, 1, 0
        %v632 = vsel %vm568, 1, 0
        %v633 = vsel %vm569, 1, 0
        %v634 = vsel %vm570, 1, 0
        %v635 = vsel %vm571, 1, 0
        %v636 = vsel %vm572, 1, 0
        %v637 = vsel %vm573, 1, 0
        %v638 = vsel %vm574, 1, 0
        %v639 = vsel %vm575, 1, 0
        %v640 = vsel %vm576, 1, 0
        %v641 = vsel %vm577, 1, 0
        %v642 = vsel %vm578, 1, 0
        %v643 = vsel %vm579, 1, 0
        %v644 = vsel %vm580, 1, 0
        %v645 = vsel %vm581, 1, 0
        %v646 = vsel %vm582, 1, 0
        %v647 = vsel %vm583, 1, 0
        %v648 = vsel %vm584, 1, 0
        %v649 = vsel %vm585, 1, 0
        %v650 = vsel %vm586, 1, 0
        %v651 = vsel %vm587, 1, 0
        %v652 = vsel %vm588, 1, 0
        %v653 = vsel %vm589, 1, 0
        %v654 = vsel %vm590, 1, 0
        %v655 = vsel %vm591, 1, 0
        %v656 = vsel %vm592, 1, 0
        %v657 = vsel %vm593, 1, 0
        %v658 = vsel %vm594, 1, 0
        %v659 = vsel %vm595, 1, 0
        %v660 = vsel %vm596, 1, 0
        %v661 = vsel %vm597, 1, 0
        %v662 = vsel %vm598, 1, 0
        %v663 = vsel %vm599, 1, 0
        %v664 = vsel %vm600, 1, 0
        %v665 = vsel %vm601, 1, 0
        %v666 = vsel %vm602, 1, 0
        %v667 = vsel %vm603, 1, 0
        %v668 = vcvt.s32.f32 %v604
        %v669 = vcvt.s32.f32 %v605
        %v670 = vcvt.s32.f32 %v606
        %v671 = vcvt.s32.f32 %v607
        %v672 = vcvt.s32.f32 %v608
        %v673 = vcvt.s32.f32 %v609
        %v674 = vcvt.s32.f32 %v610
        %v675 = vcvt.s32.f32 %v611
        %v676 = vcvt.s32.f32 %v612
        %v677 = vcvt.s32.f32 %v613
        %v678 = vcvt.s32.f32 %v614
        %v679 = vcvt.s32.f32 %v615
        %v680 = vcvt.s32.f32 %v616
        %v681 = vcvt.s32.f32 %v617
        %v682 = vcvt.s32.f32 %v618
        %v683 = vcvt.s32.f32 %v619
        %v684 = vcvt.s32.f32 %v620
        %v685 = vcvt.s32.f32 %v621
        %v686 = vcvt.s32.f32 %v622
        %v687 = vcvt.s32.f32 %v623
        %v688 = vcvt.s32.f32 %v624
        %v689 = vcvt.s32.f32 %v625
        %v690 = vcvt.s32.f32 %v626
        %v691 = vcvt.s32.f32 %v627
        %v692 = vcvt.s32.f32 %v628
        %v693 = vcvt.s32.f32 %v629
        %v694 = vcvt.s32.f32 %v630
        %v695 = vcvt.s32.f32 %v631
        %v696 = vcvt.s32.f32 %v632
        %v697 = vcvt.s32.f32 %v633
        %v698 = vcvt.s32.f32 %v634
        %v699 = vcvt.s32.f32 %v635
        %v700 = vcvt.s32.f32 %v636
        %v701 = vcvt.s32.f32 %v637
        %v702 = vcvt.s32.f32 %v638
        %v703 = vcvt.s32.f32 %v639
        %v704 = vcvt.s32.f32 %v640
        %v705 = vcvt.s32.f32 %v641
        %v706 = vcvt.s32.f32 %v642
        %v707 = vcvt.s32.f32 %v643
        %v708 = vcvt.s32.f32 %v644
        %v709 = vcvt.s32.f32 %v645
        %v710 = vcvt.s32.f32 %v646
        %v711 = vcvt.s32.f32 %v647
        %v712 = vcvt.s32.f32 %v648
        %v713 = vcvt.s32.f32 %v649
        %v714 = vcvt.s32.f32 %v650
        %v715 = vcvt.s32.f32 %v651
        %v716 = vcvt.s32.f32 %v652
        %v717 = vcvt.s32.f32 %v653
        %v718 = vcvt.s32.f32 %v654
        %v719 = vcvt.s32.f32 %v655
        %v720 = vcvt.s32.f32 %v656
        %v721 = vcvt.s32.f32 %v657
        %v722 = vcvt.s32.f32 %v658
        %v723 = vcvt.s32.f32 %v659
        %v724 = vcvt.s32.f32 %v660
        %v725 = vcvt.s32.f32 %v661
        %v726 = vcvt.s32.f32 %v662
        %v727 = vcvt.s32.f32 %v663
        %v728 = vcvt.s32.f32 %v664
        %v729 = vcvt.s32.f32 %v665
        %v730 = vcvt.s32.f32 %v666
        %v731 = vcvt.s32.f32 %v667
        %v732 = vpack.c.bf16 %v669, %v668
        %v733 = vpack.c.bf16 %v671, %v670
        %v734 = vpack.c.bf16 %v673, %v672
        %v735 = vpack.c.bf16 %v675, %v674
        %v736 = vpack.c.bf16 %v677, %v676
        %v737 = vpack.c.bf16 %v679, %v678
        %v738 = vpack.c.bf16 %v681, %v680
        %v739 = vpack.c.bf16 %v683, %v682
        %v740 = vpack.c.bf16 %v685, %v684
        %v741 = vpack.c.bf16 %v687, %v686
        %v742 = vpack.c.bf16 %v689, %v688
        %v743 = vpack.c.bf16 %v691, %v690
        %v744 = vpack.c.bf16 %v693, %v692
        %v745 = vpack.c.bf16 %v695, %v694
        %v746 = vpack.c.bf16 %v697, %v696
        %v747 = vpack.c.bf16 %v699, %v698
        %v748 = vpack.c.bf16 %v701, %v700
        %v749 = vpack.c.bf16 %v703, %v702
        %v750 = vpack.c.bf16 %v705, %v704
        %v751 = vpack.c.bf16 %v707, %v706
        %v752 = vpack.c.bf16 %v709, %v708
        %v753 = vpack.c.bf16 %v711, %v710
        %v754 = vpack.c.bf16 %v713, %v712
        %v755 = vpack.c.bf16 %v715, %v714
        %v756 = vpack.c.bf16 %v717, %v716
        %v757 = vpack.c.bf16 %v719, %v718
        %v758 = vpack.c.bf16 %v721, %v720
        %v759 = vpack.c.bf16 %v723, %v722
        %v760 = vpack.c.bf16 %v725, %v724
        %v761 = vpack.c.bf16 %v727, %v726
        %v762 = vpack.c.bf16 %v729, %v728
        %v763 = vpack.c.bf16 %v731, %v730
        %vm764 = vcmp.lt.s32.totalorder %v215, 16
        %v765 = vsub.s32 %v215, 16
        %v766 = vsel %vm764, %v215, %v765
        %v767 = vcvt.s32.f32 %v766
        %768 = vset.pattern.permute.xlu0 3
        %769 = vperm.xlu0 %768, %v150
        %v770 = vpop.permute.xlu0 %769
        %772 = vset.pattern.permute.xlu0 3
        %773 = vperm.xlu0 %772, %v151
        %v774 = vpop.permute.xlu0 %773
        %776 = vset.pattern.permute.xlu0 3
        %777 = vperm.xlu0 %776, %v152
        %v778 = vpop.permute.xlu0 %777
        %780 = vset.pattern.permute.xlu0 3
        %781 = vperm.xlu0 %780, %v153
        %v782 = vpop.permute.xlu0 %781
        %784 = vset.pattern.permute.xlu0 3
        %785 = vperm.xlu0 %784, %v154
        %v786 = vpop.permute.xlu0 %785
        %788 = vset.pattern.permute.xlu0 3
        %789 = vperm.xlu0 %788, %v155
        %v790 = vpop.permute.xlu0 %789
        %792 = vset.pattern.permute.xlu0 3
        %793 = vperm.xlu0 %792, %v156
        %v794 = vpop.permute.xlu0 %793
        %796 = vset.pattern.permute.xlu0 3
        %797 = vperm.xlu0 %796, %v157
        %v798 = vpop.permute.xlu0 %797
        %800 = vset.pattern.permute.xlu0 3
        %801 = vperm.xlu0 %800, %v158
        %v802 = vpop.permute.xlu0 %801
        %804 = vset.pattern.permute.xlu0 3
        %805 = vperm.xlu0 %804, %v159
        %v806 = vpop.permute.xlu0 %805
        %808 = vset.pattern.permute.xlu0 3
        %809 = vperm.xlu0 %808, %v160
        %v810 = vpop.permute.xlu0 %809
        %812 = vset.pattern.permute.xlu0 3
        %813 = vperm.xlu0 %812, %v161
        %v814 = vpop.permute.xlu0 %813
        %816 = vset.pattern.permute.xlu0 3
        %817 = vperm.xlu0 %816, %v162
        %v818 = vpop.permute.xlu0 %817
        %820 = vset.pattern.permute.xlu0 3
        %821 = vperm.xlu0 %820, %v163
        %v822 = vpop.permute.xlu0 %821
        %824 = vset.pattern.permute.xlu0 3
        %825 = vperm.xlu0 %824, %v164
        %v826 = vpop.permute.xlu0 %825
        %828 = vset.pattern.permute.xlu0 3
        %829 = vperm.xlu0 %828, %v165
        %v830 = vpop.permute.xlu0 %829
        %832 = vset.pattern.permute.xlu0 3
        %833 = vperm.xlu0 %832, %v166
        %v834 = vpop.permute.xlu0 %833
        %836 = vset.pattern.permute.xlu0 3
        %837 = vperm.xlu0 %836, %v167
        %v838 = vpop.permute.xlu0 %837
        %840 = vset.pattern.permute.xlu0 3
        %841 = vperm.xlu0 %840, %v168
        %v842 = vpop.permute.xlu0 %841
        %844 = vset.pattern.permute.xlu0 3
        %845 = vperm.xlu0 %844, %v169
        %v846 = vpop.permute.xlu0 %845
        %848 = vset.pattern.permute.xlu0 3
        %849 = vperm.xlu0 %848, %v170
        %v850 = vpop.permute.xlu0 %849
        %852 = vset.pattern.permute.xlu0 3
        %853 = vperm.xlu0 %852, %v171
        %v854 = vpop.permute.xlu0 %853
        %856 = vset.pattern.permute.xlu0 3
        %857 = vperm.xlu0 %856, %v172
        %v858 = vpop.permute.xlu0 %857
        %860 = vset.pattern.permute.xlu0 3
        %861 = vperm.xlu0 %860, %v173
        %v862 = vpop.permute.xlu0 %861
        %864 = vset.pattern.permute.xlu0 3
        %865 = vperm.xlu0 %864, %v174
        %v866 = vpop.permute.xlu0 %865
        %868 = vset.pattern.permute.xlu0 3
        %869 = vperm.xlu0 %868, %v175
        %v870 = vpop.permute.xlu0 %869
        %872 = vset.pattern.permute.xlu0 3
        %873 = vperm.xlu0 %872, %v176
        %v874 = vpop.permute.xlu0 %873
        %876 = vset.pattern.permute.xlu0 3
        %877 = vperm.xlu0 %876, %v177
        %v878 = vpop.permute.xlu0 %877
        %880 = vset.pattern.permute.xlu0 3
        %881 = vperm.xlu0 %880, %v178
        %v882 = vpop.permute.xlu0 %881
        %884 = vset.pattern.permute.xlu0 3
        %885 = vperm.xlu0 %884, %v179
        %v886 = vpop.permute.xlu0 %885
        %888 = vset.pattern.permute.xlu0 3
        %889 = vperm.xlu0 %888, %v180
        %v890 = vpop.permute.xlu0 %889
        %892 = vset.pattern.permute.xlu0 3
        %893 = vperm.xlu0 %892, %v181
        %v894 = vpop.permute.xlu0 %893
        %896 = vset.pattern.permute.xlu0 3
        %897 = vperm.xlu0 %896, %v182
        %v898 = vpop.permute.xlu0 %897
        %900 = vset.pattern.permute.xlu0 3
        %901 = vperm.xlu0 %900, %v183
        %v902 = vpop.permute.xlu0 %901
        %904 = vset.pattern.permute.xlu0 3
        %905 = vperm.xlu0 %904, %v184
        %v906 = vpop.permute.xlu0 %905
        %908 = vset.pattern.permute.xlu0 3
        %909 = vperm.xlu0 %908, %v185
        %v910 = vpop.permute.xlu0 %909
        %912 = vset.pattern.permute.xlu0 3
        %913 = vperm.xlu0 %912, %v186
        %v914 = vpop.permute.xlu0 %913
        %916 = vset.pattern.permute.xlu0 3
        %917 = vperm.xlu0 %916, %v187
        %v918 = vpop.permute.xlu0 %917
        %920 = vset.pattern.permute.xlu0 3
        %921 = vperm.xlu0 %920, %v188
        %v922 = vpop.permute.xlu0 %921
        %924 = vset.pattern.permute.xlu0 3
        %925 = vperm.xlu0 %924, %v189
        %v926 = vpop.permute.xlu0 %925
        %928 = vset.pattern.permute.xlu0 3
        %929 = vperm.xlu0 %928, %v190
        %v930 = vpop.permute.xlu0 %929
        %932 = vset.pattern.permute.xlu0 3
        %933 = vperm.xlu0 %932, %v191
        %v934 = vpop.permute.xlu0 %933
        %936 = vset.pattern.permute.xlu0 3
        %937 = vperm.xlu0 %936, %v192
        %v938 = vpop.permute.xlu0 %937
        %940 = vset.pattern.permute.xlu0 3
        %941 = vperm.xlu0 %940, %v193
        %v942 = vpop.permute.xlu0 %941
        %944 = vset.pattern.permute.xlu0 3
        %945 = vperm.xlu0 %944, %v194
        %v946 = vpop.permute.xlu0 %945
        %948 = vset.pattern.permute.xlu0 3
        %949 = vperm.xlu0 %948, %v195
        %v950 = vpop.permute.xlu0 %949
        %952 = vset.pattern.permute.xlu0 3
        %953 = vperm.xlu0 %952, %v196
        %v954 = vpop.permute.xlu0 %953
        %956 = vset.pattern.permute.xlu0 3
        %957 = vperm.xlu0 %956, %v197
        %v958 = vpop.permute.xlu0 %957
        %960 = vset.pattern.permute.xlu0 3
        %961 = vperm.xlu0 %960, %v198
        %v962 = vpop.permute.xlu0 %961
        %964 = vset.pattern.permute.xlu0 3
        %965 = vperm.xlu0 %964, %v199
        %v966 = vpop.permute.xlu0 %965
        %968 = vset.pattern.permute.xlu0 3
        %969 = vperm.xlu0 %968, %v200
        %v970 = vpop.permute.xlu0 %969
        %972 = vset.pattern.permute.xlu0 3
        %973 = vperm.xlu0 %972, %v201
        %v974 = vpop.permute.xlu0 %973
        %976 = vset.pattern.permute.xlu0 3
        %977 = vperm.xlu0 %976, %v202
        %v978 = vpop.permute.xlu0 %977
        %980 = vset.pattern.permute.xlu0 3
        %981 = vperm.xlu0 %980, %v203
        %v982 = vpop.permute.xlu0 %981
        %984 = vset.pattern.permute.xlu0 3
        %985 = vperm.xlu0 %984, %v204
        %v986 = vpop.permute.xlu0 %985
        %988 = vset.pattern.permute.xlu0 3
        %989 = vperm.xlu0 %988, %v205
        %v990 = vpop.permute.xlu0 %989
        %992 = vset.pattern.permute.xlu0 3
        %993 = vperm.xlu0 %992, %v206
        %v994 = vpop.permute.xlu0 %993
        %996 = vset.pattern.permute.xlu0 3
        %997 = vperm.xlu0 %996, %v207
        %v998 = vpop.permute.xlu0 %997
        %1000 = vset.pattern.permute.xlu0 3
        %1001 = vperm.xlu0 %1000, %v208
        %v1002 = vpop.permute.xlu0 %1001
        %1004 = vset.pattern.permute.xlu0 3
        %1005 = vperm.xlu0 %1004, %v209
        %v1006 = vpop.permute.xlu0 %1005
        %1008 = vset.pattern.permute.xlu0 3
        %1009 = vperm.xlu0 %1008, %v210
        %v1010 = vpop.permute.xlu0 %1009
        %1012 = vset.pattern.permute.xlu0 3
        %1013 = vperm.xlu0 %1012, %v211
        %v1014 = vpop.permute.xlu0 %1013
        %1016 = vset.pattern.permute.xlu0 3
        %1017 = vperm.xlu0 %1016, %v212
        %v1018 = vpop.permute.xlu0 %1017
        %1020 = vset.pattern.permute.xlu0 3
        %1021 = vperm.xlu0 %1020, %v213
        %v1022 = vpop.permute.xlu0 %1021
        %v1024 = vsel %vm764, %v770, 1.0
        %v1025 = vsel %vm764, %v774, 1.0
        %v1026 = vsel %vm764, %v778, 1.0
        %v1027 = vsel %vm764, %v782, 1.0
        %v1028 = vsel %vm764, %v786, 1.0
        %v1029 = vsel %vm764, %v790, 1.0
        %v1030 = vsel %vm764, %v794, 1.0
        %v1031 = vsel %vm764, %v798, 1.0
        %v1032 = vsel %vm764, %v802, 1.0
        %v1033 = vsel %vm764, %v806, 1.0
        %v1034 = vsel %vm764, %v810, 1.0
        %v1035 = vsel %vm764, %v814, 1.0
        %v1036 = vsel %vm764, %v818, 1.0
        %v1037 = vsel %vm764, %v822, 1.0
        %v1038 = vsel %vm764, %v826, 1.0
        %v1039 = vsel %vm764, %v830, 1.0
        %v1040 = vsel %vm764, %v834, 1.0
        %v1041 = vsel %vm764, %v838, 1.0
        %v1042 = vsel %vm764, %v842, 1.0
        %v1043 = vsel %vm764, %v846, 1.0
        %v1044 = vsel %vm764, %v850, 1.0
        %v1045 = vsel %vm764, %v854, 1.0
        %v1046 = vsel %vm764, %v858, 1.0
        %v1047 = vsel %vm764, %v862, 1.0
        %v1048 = vsel %vm764, %v866, 1.0
        %v1049 = vsel %vm764, %v870, 1.0
        %v1050 = vsel %vm764, %v874, 1.0
        %v1051 = vsel %vm764, %v878, 1.0
        %v1052 = vsel %vm764, %v882, 1.0
        %v1053 = vsel %vm764, %v886, 1.0
        %v1054 = vsel %vm764, %v890, 1.0
        %v1055 = vsel %vm764, %v894, 1.0
        %v1056 = vsel %vm764, %v898, 1.0
        %v1057 = vsel %vm764, %v902, 1.0
        %v1058 = vsel %vm764, %v906, 1.0
        %v1059 = vsel %vm764, %v910, 1.0
        %v1060 = vsel %vm764, %v914, 1.0
        %v1061 = vsel %vm764, %v918, 1.0
        %v1062 = vsel %vm764, %v922, 1.0
        %v1063 = vsel %vm764, %v926, 1.0
        %v1064 = vsel %vm764, %v930, 1.0
        %v1065 = vsel %vm764, %v934, 1.0
        %v1066 = vsel %vm764, %v938, 1.0
        %v1067 = vsel %vm764, %v942, 1.0
        %v1068 = vsel %vm764, %v946, 1.0
        %v1069 = vsel %vm764, %v950, 1.0
        %v1070 = vsel %vm764, %v954, 1.0
        %v1071 = vsel %vm764, %v958, 1.0
        %v1072 = vsel %vm764, %v962, 1.0
        %v1073 = vsel %vm764, %v966, 1.0
        %v1074 = vsel %vm764, %v970, 1.0
        %v1075 = vsel %vm764, %v974, 1.0
        %v1076 = vsel %vm764, %v978, 1.0
        %v1077 = vsel %vm764, %v982, 1.0
        %v1078 = vsel %vm764, %v986, 1.0
        %v1079 = vsel %vm764, %v990, 1.0
        %v1080 = vsel %vm764, %v994, 1.0
        %v1081 = vsel %vm764, %v998, 1.0
        %v1082 = vsel %vm764, %v1002, 1.0
        %v1083 = vsel %vm764, %v1006, 1.0
        %v1084 = vsel %vm764, %v1010, 1.0
        %v1085 = vsel %vm764, %v1014, 1.0
        %v1086 = vsel %vm764, %v1018, 1.0
        %v1087 = vsel %vm764, %v1022, 1.0
        %1088 = vset.pattern.permute.xlu0 1
        %1089 = vperm.xlu0 %1088, %v150
        %v1090 = vpop.permute.xlu0 %1089
        %1092 = vset.pattern.permute.xlu0 1
        %1093 = vperm.xlu0 %1092, %v151
        %v1094 = vpop.permute.xlu0 %1093
        %1096 = vset.pattern.permute.xlu0 1
        %1097 = vperm.xlu0 %1096, %v152
        %v1098 = vpop.permute.xlu0 %1097
        %1100 = vset.pattern.permute.xlu0 1
        %1101 = vperm.xlu0 %1100, %v153
        %v1102 = vpop.permute.xlu0 %1101
        %1104 = vset.pattern.permute.xlu0 1
        %1105 = vperm.xlu0 %1104, %v154
        %v1106 = vpop.permute.xlu0 %1105
        %1108 = vset.pattern.permute.xlu0 1
        %1109 = vperm.xlu0 %1108, %v155
        %v1110 = vpop.permute.xlu0 %1109
        %1112 = vset.pattern.permute.xlu0 1
        %1113 = vperm.xlu0 %1112, %v156
        %v1114 = vpop.permute.xlu0 %1113
        %1116 = vset.pattern.permute.xlu0 1
        %1117 = vperm.xlu0 %1116, %v157
        %v1118 = vpop.permute.xlu0 %1117
        %1120 = vset.pattern.permute.xlu0 1
        %1121 = vperm.xlu0 %1120, %v158
        %v1122 = vpop.permute.xlu0 %1121
        %1124 = vset.pattern.permute.xlu0 1
        %1125 = vperm.xlu0 %1124, %v159
        %v1126 = vpop.permute.xlu0 %1125
        %1128 = vset.pattern.permute.xlu0 1
        %1129 = vperm.xlu0 %1128, %v160
        %v1130 = vpop.permute.xlu0 %1129
        %1132 = vset.pattern.permute.xlu0 1
        %1133 = vperm.xlu0 %1132, %v161
        %v1134 = vpop.permute.xlu0 %1133
        %1136 = vset.pattern.permute.xlu0 1
        %1137 = vperm.xlu0 %1136, %v162
        %v1138 = vpop.permute.xlu0 %1137
        %1140 = vset.pattern.permute.xlu0 1
        %1141 = vperm.xlu0 %1140, %v163
        %v1142 = vpop.permute.xlu0 %1141
        %1144 = vset.pattern.permute.xlu0 1
        %1145 = vperm.xlu0 %1144, %v164
        %v1146 = vpop.permute.xlu0 %1145
        %1148 = vset.pattern.permute.xlu0 1
        %1149 = vperm.xlu0 %1148, %v165
        %v1150 = vpop.permute.xlu0 %1149
        %1152 = vset.pattern.permute.xlu0 1
        %1153 = vperm.xlu0 %1152, %v166
        %v1154 = vpop.permute.xlu0 %1153
        %1156 = vset.pattern.permute.xlu0 1
        %1157 = vperm.xlu0 %1156, %v167
        %v1158 = vpop.permute.xlu0 %1157
        %1160 = vset.pattern.permute.xlu0 1
        %1161 = vperm.xlu0 %1160, %v168
        %v1162 = vpop.permute.xlu0 %1161
        %1164 = vset.pattern.permute.xlu0 1
        %1165 = vperm.xlu0 %1164, %v169
        %v1166 = vpop.permute.xlu0 %1165
        %1168 = vset.pattern.permute.xlu0 1
        %1169 = vperm.xlu0 %1168, %v170
        %v1170 = vpop.permute.xlu0 %1169
        %1172 = vset.pattern.permute.xlu0 1
        %1173 = vperm.xlu0 %1172, %v171
        %v1174 = vpop.permute.xlu0 %1173
        %1176 = vset.pattern.permute.xlu0 1
        %1177 = vperm.xlu0 %1176, %v172
        %v1178 = vpop.permute.xlu0 %1177
        %1180 = vset.pattern.permute.xlu0 1
        %1181 = vperm.xlu0 %1180, %v173
        %v1182 = vpop.permute.xlu0 %1181
        %1184 = vset.pattern.permute.xlu0 1
        %1185 = vperm.xlu0 %1184, %v174
        %v1186 = vpop.permute.xlu0 %1185
        %1188 = vset.pattern.permute.xlu0 1
        %1189 = vperm.xlu0 %1188, %v175
        %v1190 = vpop.permute.xlu0 %1189
        %1192 = vset.pattern.permute.xlu0 1
        %1193 = vperm.xlu0 %1192, %v176
        %v1194 = vpop.permute.xlu0 %1193
        %1196 = vset.pattern.permute.xlu0 1
        %1197 = vperm.xlu0 %1196, %v177
        %v1198 = vpop.permute.xlu0 %1197
        %1200 = vset.pattern.permute.xlu0 1
        %1201 = vperm.xlu0 %1200, %v178
        %v1202 = vpop.permute.xlu0 %1201
        %1204 = vset.pattern.permute.xlu0 1
        %1205 = vperm.xlu0 %1204, %v179
        %v1206 = vpop.permute.xlu0 %1205
        %1208 = vset.pattern.permute.xlu0 1
        %1209 = vperm.xlu0 %1208, %v180
        %v1210 = vpop.permute.xlu0 %1209
        %1212 = vset.pattern.permute.xlu0 1
        %1213 = vperm.xlu0 %1212, %v181
        %v1214 = vpop.permute.xlu0 %1213
        %1216 = vset.pattern.permute.xlu0 1
        %1217 = vperm.xlu0 %1216, %v182
        %v1218 = vpop.permute.xlu0 %1217
        %1220 = vset.pattern.permute.xlu0 1
        %1221 = vperm.xlu0 %1220, %v183
        %v1222 = vpop.permute.xlu0 %1221
        %1224 = vset.pattern.permute.xlu0 1
        %1225 = vperm.xlu0 %1224, %v184
        %v1226 = vpop.permute.xlu0 %1225
        %1228 = vset.pattern.permute.xlu0 1
        %1229 = vperm.xlu0 %1228, %v185
        %v1230 = vpop.permute.xlu0 %1229
        %1232 = vset.pattern.permute.xlu0 1
        %1233 = vperm.xlu0 %1232, %v186
        %v1234 = vpop.permute.xlu0 %1233
        %1236 = vset.pattern.permute.xlu0 1
        %1237 = vperm.xlu0 %1236, %v187
        %v1238 = vpop.permute.xlu0 %1237
        %1240 = vset.pattern.permute.xlu0 1
        %1241 = vperm.xlu0 %1240, %v188
        %v1242 = vpop.permute.xlu0 %1241
        %1244 = vset.pattern.permute.xlu0 1
        %1245 = vperm.xlu0 %1244, %v189
        %v1246 = vpop.permute.xlu0 %1245
        %1248 = vset.pattern.permute.xlu0 1
        %1249 = vperm.xlu0 %1248, %v190
        %v1250 = vpop.permute.xlu0 %1249
        %1252 = vset.pattern.permute.xlu0 1
        %1253 = vperm.xlu0 %1252, %v191
        %v1254 = vpop.permute.xlu0 %1253
        %1256 = vset.pattern.permute.xlu0 1
        %1257 = vperm.xlu0 %1256, %v192
        %v1258 = vpop.permute.xlu0 %1257
        %1260 = vset.pattern.permute.xlu0 1
        %1261 = vperm.xlu0 %1260, %v193
        %v1262 = vpop.permute.xlu0 %1261
        %1264 = vset.pattern.permute.xlu0 1
        %1265 = vperm.xlu0 %1264, %v194
        %v1266 = vpop.permute.xlu0 %1265
        %1268 = vset.pattern.permute.xlu0 1
        %1269 = vperm.xlu0 %1268, %v195
        %v1270 = vpop.permute.xlu0 %1269
        %1272 = vset.pattern.permute.xlu0 1
        %1273 = vperm.xlu0 %1272, %v196
        %v1274 = vpop.permute.xlu0 %1273
        %1276 = vset.pattern.permute.xlu0 1
        %1277 = vperm.xlu0 %1276, %v197
        %v1278 = vpop.permute.xlu0 %1277
        %1280 = vset.pattern.permute.xlu0 1
        %1281 = vperm.xlu0 %1280, %v198
        %v1282 = vpop.permute.xlu0 %1281
        %1284 = vset.pattern.permute.xlu0 1
        %1285 = vperm.xlu0 %1284, %v199
        %v1286 = vpop.permute.xlu0 %1285
        %1288 = vset.pattern.permute.xlu0 1
        %1289 = vperm.xlu0 %1288, %v200
        %v1290 = vpop.permute.xlu0 %1289
        %1292 = vset.pattern.permute.xlu0 1
        %1293 = vperm.xlu0 %1292, %v201
        %v1294 = vpop.permute.xlu0 %1293
        %1296 = vset.pattern.permute.xlu0 1
        %1297 = vperm.xlu0 %1296, %v202
        %v1298 = vpop.permute.xlu0 %1297
        %1300 = vset.pattern.permute.xlu0 1
        %1301 = vperm.xlu0 %1300, %v203
        %v1302 = vpop.permute.xlu0 %1301
        %1304 = vset.pattern.permute.xlu0 1
        %1305 = vperm.xlu0 %1304, %v204
        %v1306 = vpop.permute.xlu0 %1305
        %1308 = vset.pattern.permute.xlu0 1
        %1309 = vperm.xlu0 %1308, %v205
        %v1310 = vpop.permute.xlu0 %1309
        %1312 = vset.pattern.permute.xlu0 1
        %1313 = vperm.xlu0 %1312, %v206
        %v1314 = vpop.permute.xlu0 %1313
        %1316 = vset.pattern.permute.xlu0 1
        %1317 = vperm.xlu0 %1316, %v207
        %v1318 = vpop.permute.xlu0 %1317
        %1320 = vset.pattern.permute.xlu0 1
        %1321 = vperm.xlu0 %1320, %v208
        %v1322 = vpop.permute.xlu0 %1321
        %1324 = vset.pattern.permute.xlu0 1
        %1325 = vperm.xlu0 %1324, %v209
        %v1326 = vpop.permute.xlu0 %1325
        %1328 = vset.pattern.permute.xlu0 1
        %1329 = vperm.xlu0 %1328, %v210
        %v1330 = vpop.permute.xlu0 %1329
        %1332 = vset.pattern.permute.xlu0 1
        %1333 = vperm.xlu0 %1332, %v211
        %v1334 = vpop.permute.xlu0 %1333
        %1336 = vset.pattern.permute.xlu0 1
        %1337 = vperm.xlu0 %1336, %v212
        %v1338 = vpop.permute.xlu0 %1337
        %1340 = vset.pattern.permute.xlu0 1
        %1341 = vperm.xlu0 %1340, %v213
        %v1342 = vpop.permute.xlu0 %1341
        %vm1344 = vcmp.eq.f32.partialorder %v767, %v1090
        %vm1345 = vcmp.eq.f32.partialorder %v767, %v1094
        %vm1346 = vcmp.eq.f32.partialorder %v767, %v1098
        %vm1347 = vcmp.eq.f32.partialorder %v767, %v1102
        %vm1348 = vcmp.eq.f32.partialorder %v767, %v1106
        %vm1349 = vcmp.eq.f32.partialorder %v767, %v1110
        %vm1350 = vcmp.eq.f32.partialorder %v767, %v1114
        %vm1351 = vcmp.eq.f32.partialorder %v767, %v1118
        %vm1352 = vcmp.eq.f32.partialorder %v767, %v1122
        %vm1353 = vcmp.eq.f32.partialorder %v767, %v1126
        %vm1354 = vcmp.eq.f32.partialorder %v767, %v1130
        %vm1355 = vcmp.eq.f32.partialorder %v767, %v1134
        %vm1356 = vcmp.eq.f32.partialorder %v767, %v1138
        %vm1357 = vcmp.eq.f32.partialorder %v767, %v1142
        %vm1358 = vcmp.eq.f32.partialorder %v767, %v1146
        %vm1359 = vcmp.eq.f32.partialorder %v767, %v1150
        %vm1360 = vcmp.eq.f32.partialorder %v767, %v1154
        %vm1361 = vcmp.eq.f32.partialorder %v767, %v1158
        %vm1362 = vcmp.eq.f32.partialorder %v767, %v1162
        %vm1363 = vcmp.eq.f32.partialorder %v767, %v1166
        %vm1364 = vcmp.eq.f32.partialorder %v767, %v1170
        %vm1365 = vcmp.eq.f32.partialorder %v767, %v1174
        %vm1366 = vcmp.eq.f32.partialorder %v767, %v1178
        %vm1367 = vcmp.eq.f32.partialorder %v767, %v1182
        %vm1368 = vcmp.eq.f32.partialorder %v767, %v1186
        %vm1369 = vcmp.eq.f32.partialorder %v767, %v1190
        %vm1370 = vcmp.eq.f32.partialorder %v767, %v1194
        %vm1371 = vcmp.eq.f32.partialorder %v767, %v1198
        %vm1372 = vcmp.eq.f32.partialorder %v767, %v1202
        %vm1373 = vcmp.eq.f32.partialorder %v767, %v1206
        %vm1374 = vcmp.eq.f32.partialorder %v767, %v1210
        %vm1375 = vcmp.eq.f32.partialorder %v767, %v1214
        %vm1376 = vcmp.eq.f32.partialorder %v767, %v1218
        %vm1377 = vcmp.eq.f32.partialorder %v767, %v1222
        %vm1378 = vcmp.eq.f32.partialorder %v767, %v1226
        %vm1379 = vcmp.eq.f32.partialorder %v767, %v1230
        %vm1380 = vcmp.eq.f32.partialorder %v767, %v1234
        %vm1381 = vcmp.eq.f32.partialorder %v767, %v1238
        %vm1382 = vcmp.eq.f32.partialorder %v767, %v1242
        %vm1383 = vcmp.eq.f32.partialorder %v767, %v1246
        %vm1384 = vcmp.eq.f32.partialorder %v767, %v1250
        %vm1385 = vcmp.eq.f32.partialorder %v767, %v1254
        %vm1386 = vcmp.eq.f32.partialorder %v767, %v1258
        %vm1387 = vcmp.eq.f32.partialorder %v767, %v1262
        %vm1388 = vcmp.eq.f32.partialorder %v767, %v1266
        %vm1389 = vcmp.eq.f32.partialorder %v767, %v1270
        %vm1390 = vcmp.eq.f32.partialorder %v767, %v1274
        %vm1391 = vcmp.eq.f32.partialorder %v767, %v1278
        %vm1392 = vcmp.eq.f32.partialorder %v767, %v1282
        %vm1393 = vcmp.eq.f32.partialorder %v767, %v1286
        %vm1394 = vcmp.eq.f32.partialorder %v767, %v1290
        %vm1395 = vcmp.eq.f32.partialorder %v767, %v1294
        %vm1396 = vcmp.eq.f32.partialorder %v767, %v1298
        %vm1397 = vcmp.eq.f32.partialorder %v767, %v1302
        %vm1398 = vcmp.eq.f32.partialorder %v767, %v1306
        %vm1399 = vcmp.eq.f32.partialorder %v767, %v1310
        %vm1400 = vcmp.eq.f32.partialorder %v767, %v1314
        %vm1401 = vcmp.eq.f32.partialorder %v767, %v1318
        %vm1402 = vcmp.eq.f32.partialorder %v767, %v1322
        %vm1403 = vcmp.eq.f32.partialorder %v767, %v1326
        %vm1404 = vcmp.eq.f32.partialorder %v767, %v1330
        %vm1405 = vcmp.eq.f32.partialorder %v767, %v1334
        %vm1406 = vcmp.eq.f32.partialorder %v767, %v1338
        %vm1407 = vcmp.eq.f32.partialorder %v767, %v1342
        %v1408 = vsel %vm1344, 1, 0
        %v1409 = vsel %vm1345, 1, 0
        %v1410 = vsel %vm1346, 1, 0
        %v1411 = vsel %vm1347, 1, 0
        %v1412 = vsel %vm1348, 1, 0
        %v1413 = vsel %vm1349, 1, 0
        %v1414 = vsel %vm1350, 1, 0
        %v1415 = vsel %vm1351, 1, 0
        %v1416 = vsel %vm1352, 1, 0
        %v1417 = vsel %vm1353, 1, 0
        %v1418 = vsel %vm1354, 1, 0
        %v1419 = vsel %vm1355, 1, 0
        %v1420 = vsel %vm1356, 1, 0
        %v1421 = vsel %vm1357, 1, 0
        %v1422 = vsel %vm1358, 1, 0
        %v1423 = vsel %vm1359, 1, 0
        %v1424 = vsel %vm1360, 1, 0
        %v1425 = vsel %vm1361, 1, 0
        %v1426 = vsel %vm1362, 1, 0
        %v1427 = vsel %vm1363, 1, 0
        %v1428 = vsel %vm1364, 1, 0
        %v1429 = vsel %vm1365, 1, 0
        %v1430 = vsel %vm1366, 1, 0
        %v1431 = vsel %vm1367, 1, 0
        %v1432 = vsel %vm1368, 1, 0
        %v1433 = vsel %vm1369, 1, 0
        %v1434 = vsel %vm1370, 1, 0
        %v1435 = vsel %vm1371, 1, 0
        %v1436 = vsel %vm1372, 1, 0
        %v1437 = vsel %vm1373, 1, 0
        %v1438 = vsel %vm1374, 1, 0
        %v1439 = vsel %vm1375, 1, 0
        %v1440 = vsel %vm1376, 1, 0
        %v1441 = vsel %vm1377, 1, 0
        %v1442 = vsel %vm1378, 1, 0
        %v1443 = vsel %vm1379, 1, 0
        %v1444 = vsel %vm1380, 1, 0
        %v1445 = vsel %vm1381, 1, 0
        %v1446 = vsel %vm1382, 1, 0
        %v1447 = vsel %vm1383, 1, 0
        %v1448 = vsel %vm1384, 1, 0
        %v1449 = vsel %vm1385, 1, 0
        %v1450 = vsel %vm1386, 1, 0
        %v1451 = vsel %vm1387, 1, 0
        %v1452 = vsel %vm1388, 1, 0
        %v1453 = vsel %vm1389, 1, 0
        %v1454 = vsel %vm1390, 1, 0
        %v1455 = vsel %vm1391, 1, 0
        %v1456 = vsel %vm1392, 1, 0
        %v1457 = vsel %vm1393, 1, 0
        %v1458 = vsel %vm1394, 1, 0
        %v1459 = vsel %vm1395, 1, 0
        %v1460 = vsel %vm1396, 1, 0
        %v1461 = vsel %vm1397, 1, 0
        %v1462 = vsel %vm1398, 1, 0
        %v1463 = vsel %vm1399, 1, 0
        %v1464 = vsel %vm1400, 1, 0
        %v1465 = vsel %vm1401, 1, 0
        %v1466 = vsel %vm1402, 1, 0
        %v1467 = vsel %vm1403, 1, 0
        %v1468 = vsel %vm1404, 1, 0
        %v1469 = vsel %vm1405, 1, 0
        %v1470 = vsel %vm1406, 1, 0
        %v1471 = vsel %vm1407, 1, 0
        %v1472 = vcvt.s32.f32 %v1408
        %v1473 = vcvt.s32.f32 %v1409
        %v1474 = vcvt.s32.f32 %v1410
        %v1475 = vcvt.s32.f32 %v1411
        %v1476 = vcvt.s32.f32 %v1412
        %v1477 = vcvt.s32.f32 %v1413
        %v1478 = vcvt.s32.f32 %v1414
        %v1479 = vcvt.s32.f32 %v1415
        %v1480 = vcvt.s32.f32 %v1416
        %v1481 = vcvt.s32.f32 %v1417
        %v1482 = vcvt.s32.f32 %v1418
        %v1483 = vcvt.s32.f32 %v1419
        %v1484 = vcvt.s32.f32 %v1420
        %v1485 = vcvt.s32.f32 %v1421
        %v1486 = vcvt.s32.f32 %v1422
        %v1487 = vcvt.s32.f32 %v1423
        %v1488 = vcvt.s32.f32 %v1424
        %v1489 = vcvt.s32.f32 %v1425
        %v1490 = vcvt.s32.f32 %v1426
        %v1491 = vcvt.s32.f32 %v1427
        %v1492 = vcvt.s32.f32 %v1428
        %v1493 = vcvt.s32.f32 %v1429
        %v1494 = vcvt.s32.f32 %v1430
        %v1495 = vcvt.s32.f32 %v1431
        %v1496 = vcvt.s32.f32 %v1432
        %v1497 = vcvt.s32.f32 %v1433
        %v1498 = vcvt.s32.f32 %v1434
        %v1499 = vcvt.s32.f32 %v1435
        %v1500 = vcvt.s32.f32 %v1436
        %v1501 = vcvt.s32.f32 %v1437
        %v1502 = vcvt.s32.f32 %v1438
        %v1503 = vcvt.s32.f32 %v1439
        %v1504 = vcvt.s32.f32 %v1440
        %v1505 = vcvt.s32.f32 %v1441
        %v1506 = vcvt.s32.f32 %v1442
        %v1507 = vcvt.s32.f32 %v1443
        %v1508 = vcvt.s32.f32 %v1444
        %v1509 = vcvt.s32.f32 %v1445
        %v1510 = vcvt.s32.f32 %v1446
        %v1511 = vcvt.s32.f32 %v1447
        %v1512 = vcvt.s32.f32 %v1448
        %v1513 = vcvt.s32.f32 %v1449
        %v1514 = vcvt.s32.f32 %v1450
        %v1515 = vcvt.s32.f32 %v1451
        %v1516 = vcvt.s32.f32 %v1452
        %v1517 = vcvt.s32.f32 %v1453
        %v1518 = vcvt.s32.f32 %v1454
        %v1519 = vcvt.s32.f32 %v1455
        %v1520 = vcvt.s32.f32 %v1456
        %v1521 = vcvt.s32.f32 %v1457
        %v1522 = vcvt.s32.f32 %v1458
        %v1523 = vcvt.s32.f32 %v1459
        %v1524 = vcvt.s32.f32 %v1460
        %v1525 = vcvt.s32.f32 %v1461
        %v1526 = vcvt.s32.f32 %v1462
        %v1527 = vcvt.s32.f32 %v1463
        %v1528 = vcvt.s32.f32 %v1464
        %v1529 = vcvt.s32.f32 %v1465
        %v1530 = vcvt.s32.f32 %v1466
        %v1531 = vcvt.s32.f32 %v1467
        %v1532 = vcvt.s32.f32 %v1468
        %v1533 = vcvt.s32.f32 %v1469
        %v1534 = vcvt.s32.f32 %v1470
        %v1535 = vcvt.s32.f32 %v1471
        %1536 = vset.pattern.permute.xlu0 2
        %1537 = vperm.xlu0 %1536, %v150
        %v1538 = vpop.permute.xlu0 %1537
        %1540 = vset.pattern.permute.xlu0 2
        %1541 = vperm.xlu0 %1540, %v151
        %v1542 = vpop.permute.xlu0 %1541
        %1544 = vset.pattern.permute.xlu0 2
        %1545 = vperm.xlu0 %1544, %v152
        %v1546 = vpop.permute.xlu0 %1545
        %1548 = vset.pattern.permute.xlu0 2
        %1549 = vperm.xlu0 %1548, %v153
        %v1550 = vpop.permute.xlu0 %1549
        %1552 = vset.pattern.permute.xlu0 2
        %1553 = vperm.xlu0 %1552, %v154
        %v1554 = vpop.permute.xlu0 %1553
        %1556 = vset.pattern.permute.xlu0 2
        %1557 = vperm.xlu0 %1556, %v155
        %v1558 = vpop.permute.xlu0 %1557
        %1560 = vset.pattern.permute.xlu0 2
        %1561 = vperm.xlu0 %1560, %v156
        %v1562 = vpop.permute.xlu0 %1561
        %1564 = vset.pattern.permute.xlu0 2
        %1565 = vperm.xlu0 %1564, %v157
        %v1566 = vpop.permute.xlu0 %1565
        %1568 = vset.pattern.permute.xlu0 2
        %1569 = vperm.xlu0 %1568, %v158
        %v1570 = vpop.permute.xlu0 %1569
        %1572 = vset.pattern.permute.xlu0 2
        %1573 = vperm.xlu0 %1572, %v159
        %v1574 = vpop.permute.xlu0 %1573
        %1576 = vset.pattern.permute.xlu0 2
        %1577 = vperm.xlu0 %1576, %v160
        %v1578 = vpop.permute.xlu0 %1577
        %1580 = vset.pattern.permute.xlu0 2
        %1581 = vperm.xlu0 %1580, %v161
        %v1582 = vpop.permute.xlu0 %1581
        %1584 = vset.pattern.permute.xlu0 2
        %1585 = vperm.xlu0 %1584, %v162
        %v1586 = vpop.permute.xlu0 %1585
        %1588 = vset.pattern.permute.xlu0 2
        %1589 = vperm.xlu0 %1588, %v163
        %v1590 = vpop.permute.xlu0 %1589
        %1592 = vset.pattern.permute.xlu0 2
        %1593 = vperm.xlu0 %1592, %v164
        %v1594 = vpop.permute.xlu0 %1593
        %1596 = vset.pattern.permute.xlu0 2
        %1597 = vperm.xlu0 %1596, %v165
        %v1598 = vpop.permute.xlu0 %1597
        %1600 = vset.pattern.permute.xlu0 2
        %1601 = vperm.xlu0 %1600, %v166
        %v1602 = vpop.permute.xlu0 %1601
        %1604 = vset.pattern.permute.xlu0 2
        %1605 = vperm.xlu0 %1604, %v167
        %v1606 = vpop.permute.xlu0 %1605
        %1608 = vset.pattern.permute.xlu0 2
        %1609 = vperm.xlu0 %1608, %v168
        %v1610 = vpop.permute.xlu0 %1609
        %1612 = vset.pattern.permute.xlu0 2
        %1613 = vperm.xlu0 %1612, %v169
        %v1614 = vpop.permute.xlu0 %1613
        %1616 = vset.pattern.permute.xlu0 2
        %1617 = vperm.xlu0 %1616, %v170
        %v1618 = vpop.permute.xlu0 %1617
        %1620 = vset.pattern.permute.xlu0 2
        %1621 = vperm.xlu0 %1620, %v171
        %v1622 = vpop.permute.xlu0 %1621
        %1624 = vset.pattern.permute.xlu0 2
        %1625 = vperm.xlu0 %1624, %v172
        %v1626 = vpop.permute.xlu0 %1625
        %1628 = vset.pattern.permute.xlu0 2
        %1629 = vperm.xlu0 %1628, %v173
        %v1630 = vpop.permute.xlu0 %1629
        %1632 = vset.pattern.permute.xlu0 2
        %1633 = vperm.xlu0 %1632, %v174
        %v1634 = vpop.permute.xlu0 %1633
        %1636 = vset.pattern.permute.xlu0 2
        %1637 = vperm.xlu0 %1636, %v175
        %v1638 = vpop.permute.xlu0 %1637
        %1640 = vset.pattern.permute.xlu0 2
        %1641 = vperm.xlu0 %1640, %v176
        %v1642 = vpop.permute.xlu0 %1641
        %1644 = vset.pattern.permute.xlu0 2
        %1645 = vperm.xlu0 %1644, %v177
        %v1646 = vpop.permute.xlu0 %1645
        %1648 = vset.pattern.permute.xlu0 2
        %1649 = vperm.xlu0 %1648, %v178
        %v1650 = vpop.permute.xlu0 %1649
        %1652 = vset.pattern.permute.xlu0 2
        %1653 = vperm.xlu0 %1652, %v179
        %v1654 = vpop.permute.xlu0 %1653
        %1656 = vset.pattern.permute.xlu0 2
        %1657 = vperm.xlu0 %1656, %v180
        %v1658 = vpop.permute.xlu0 %1657
        %1660 = vset.pattern.permute.xlu0 2
        %1661 = vperm.xlu0 %1660, %v181
        %v1662 = vpop.permute.xlu0 %1661
        %1664 = vset.pattern.permute.xlu0 2
        %1665 = vperm.xlu0 %1664, %v182
        %v1666 = vpop.permute.xlu0 %1665
        %1668 = vset.pattern.permute.xlu0 2
        %1669 = vperm.xlu0 %1668, %v183
        %v1670 = vpop.permute.xlu0 %1669
        %1672 = vset.pattern.permute.xlu0 2
        %1673 = vperm.xlu0 %1672, %v184
        %v1674 = vpop.permute.xlu0 %1673
        %1676 = vset.pattern.permute.xlu0 2
        %1677 = vperm.xlu0 %1676, %v185
        %v1678 = vpop.permute.xlu0 %1677
        %1680 = vset.pattern.permute.xlu0 2
        %1681 = vperm.xlu0 %1680, %v186
        %v1682 = vpop.permute.xlu0 %1681
        %1684 = vset.pattern.permute.xlu0 2
        %1685 = vperm.xlu0 %1684, %v187
        %v1686 = vpop.permute.xlu0 %1685
        %1688 = vset.pattern.permute.xlu0 2
        %1689 = vperm.xlu0 %1688, %v188
        %v1690 = vpop.permute.xlu0 %1689
        %1692 = vset.pattern.permute.xlu0 2
        %1693 = vperm.xlu0 %1692, %v189
        %v1694 = vpop.permute.xlu0 %1693
        %1696 = vset.pattern.permute.xlu0 2
        %1697 = vperm.xlu0 %1696, %v190
        %v1698 = vpop.permute.xlu0 %1697
        %1700 = vset.pattern.permute.xlu0 2
        %1701 = vperm.xlu0 %1700, %v191
        %v1702 = vpop.permute.xlu0 %1701
        %1704 = vset.pattern.permute.xlu0 2
        %1705 = vperm.xlu0 %1704, %v192
        %v1706 = vpop.permute.xlu0 %1705
        %1708 = vset.pattern.permute.xlu0 2
        %1709 = vperm.xlu0 %1708, %v193
        %v1710 = vpop.permute.xlu0 %1709
        %1712 = vset.pattern.permute.xlu0 2
        %1713 = vperm.xlu0 %1712, %v194
        %v1714 = vpop.permute.xlu0 %1713
        %1716 = vset.pattern.permute.xlu0 2
        %1717 = vperm.xlu0 %1716, %v195
        %v1718 = vpop.permute.xlu0 %1717
        %1720 = vset.pattern.permute.xlu0 2
        %1721 = vperm.xlu0 %1720, %v196
        %v1722 = vpop.permute.xlu0 %1721
        %1724 = vset.pattern.permute.xlu0 2
        %1725 = vperm.xlu0 %1724, %v197
        %v1726 = vpop.permute.xlu0 %1725
        %1728 = vset.pattern.permute.xlu0 2
        %1729 = vperm.xlu0 %1728, %v198
        %v1730 = vpop.permute.xlu0 %1729
        %1732 = vset.pattern.permute.xlu0 2
        %1733 = vperm.xlu0 %1732, %v199
        %v1734 = vpop.permute.xlu0 %1733
        %1736 = vset.pattern.permute.xlu0 2
        %1737 = vperm.xlu0 %1736, %v200
        %v1738 = vpop.permute.xlu0 %1737
        %1740 = vset.pattern.permute.xlu0 2
        %1741 = vperm.xlu0 %1740, %v201
        %v1742 = vpop.permute.xlu0 %1741
        %1744 = vset.pattern.permute.xlu0 2
        %1745 = vperm.xlu0 %1744, %v202
        %v1746 = vpop.permute.xlu0 %1745
        %1748 = vset.pattern.permute.xlu0 2
        %1749 = vperm.xlu0 %1748, %v203
        %v1750 = vpop.permute.xlu0 %1749
        %1752 = vset.pattern.permute.xlu0 2
        %1753 = vperm.xlu0 %1752, %v204
        %v1754 = vpop.permute.xlu0 %1753
        %1756 = vset.pattern.permute.xlu0 2
        %1757 = vperm.xlu0 %1756, %v205
        %v1758 = vpop.permute.xlu0 %1757
        %1760 = vset.pattern.permute.xlu0 2
        %1761 = vperm.xlu0 %1760, %v206
        %v1762 = vpop.permute.xlu0 %1761
        %1764 = vset.pattern.permute.xlu0 2
        %1765 = vperm.xlu0 %1764, %v207
        %v1766 = vpop.permute.xlu0 %1765
        %1768 = vset.pattern.permute.xlu0 2
        %1769 = vperm.xlu0 %1768, %v208
        %v1770 = vpop.permute.xlu0 %1769
        %1772 = vset.pattern.permute.xlu0 2
        %1773 = vperm.xlu0 %1772, %v209
        %v1774 = vpop.permute.xlu0 %1773
        %1776 = vset.pattern.permute.xlu0 2
        %1777 = vperm.xlu0 %1776, %v210
        %v1778 = vpop.permute.xlu0 %1777
        %1780 = vset.pattern.permute.xlu0 2
        %1781 = vperm.xlu0 %1780, %v211
        %v1782 = vpop.permute.xlu0 %1781
        %1784 = vset.pattern.permute.xlu0 2
        %1785 = vperm.xlu0 %1784, %v212
        %v1786 = vpop.permute.xlu0 %1785
        %1788 = vset.pattern.permute.xlu0 2
        %1789 = vperm.xlu0 %1788, %v213
        %v1790 = vpop.permute.xlu0 %1789
        %v1792 = vmul.f32 %v1472, %v1538
        %v1793 = vmul.f32 %v1473, %v1542
        %v1794 = vmul.f32 %v1474, %v1546
        %v1795 = vmul.f32 %v1475, %v1550
        %v1796 = vmul.f32 %v1476, %v1554
        %v1797 = vmul.f32 %v1477, %v1558
        %v1798 = vmul.f32 %v1478, %v1562
        %v1799 = vmul.f32 %v1479, %v1566
        %v1800 = vmul.f32 %v1480, %v1570
        %v1801 = vmul.f32 %v1481, %v1574
        %v1802 = vmul.f32 %v1482, %v1578
        %v1803 = vmul.f32 %v1483, %v1582
        %v1804 = vmul.f32 %v1484, %v1586
        %v1805 = vmul.f32 %v1485, %v1590
        %v1806 = vmul.f32 %v1486, %v1594
        %v1807 = vmul.f32 %v1487, %v1598
        %v1808 = vmul.f32 %v1488, %v1602
        %v1809 = vmul.f32 %v1489, %v1606
        %v1810 = vmul.f32 %v1490, %v1610
        %v1811 = vmul.f32 %v1491, %v1614
        %v1812 = vmul.f32 %v1492, %v1618
        %v1813 = vmul.f32 %v1493, %v1622
        %v1814 = vmul.f32 %v1494, %v1626
        %v1815 = vmul.f32 %v1495, %v1630
        %v1816 = vmul.f32 %v1496, %v1634
        %v1817 = vmul.f32 %v1497, %v1638
        %v1818 = vmul.f32 %v1498, %v1642
        %v1819 = vmul.f32 %v1499, %v1646
        %v1820 = vmul.f32 %v1500, %v1650
        %v1821 = vmul.f32 %v1501, %v1654
        %v1822 = vmul.f32 %v1502, %v1658
        %v1823 = vmul.f32 %v1503, %v1662
        %v1824 = vmul.f32 %v1504, %v1666
        %v1825 = vmul.f32 %v1505, %v1670
        %v1826 = vmul.f32 %v1506, %v1674
        %v1827 = vmul.f32 %v1507, %v1678
        %v1828 = vmul.f32 %v1508, %v1682
        %v1829 = vmul.f32 %v1509, %v1686
        %v1830 = vmul.f32 %v1510, %v1690
        %v1831 = vmul.f32 %v1511, %v1694
        %v1832 = vmul.f32 %v1512, %v1698
        %v1833 = vmul.f32 %v1513, %v1702
        %v1834 = vmul.f32 %v1514, %v1706
        %v1835 = vmul.f32 %v1515, %v1710
        %v1836 = vmul.f32 %v1516, %v1714
        %v1837 = vmul.f32 %v1517, %v1718
        %v1838 = vmul.f32 %v1518, %v1722
        %v1839 = vmul.f32 %v1519, %v1726
        %v1840 = vmul.f32 %v1520, %v1730
        %v1841 = vmul.f32 %v1521, %v1734
        %v1842 = vmul.f32 %v1522, %v1738
        %v1843 = vmul.f32 %v1523, %v1742
        %v1844 = vmul.f32 %v1524, %v1746
        %v1845 = vmul.f32 %v1525, %v1750
        %v1846 = vmul.f32 %v1526, %v1754
        %v1847 = vmul.f32 %v1527, %v1758
        %v1848 = vmul.f32 %v1528, %v1762
        %v1849 = vmul.f32 %v1529, %v1766
        %v1850 = vmul.f32 %v1530, %v1770
        %v1851 = vmul.f32 %v1531, %v1774
        %v1852 = vmul.f32 %v1532, %v1778
        %v1853 = vmul.f32 %v1533, %v1782
        %v1854 = vmul.f32 %v1534, %v1786
        %v1855 = vmul.f32 %v1535, %v1790
        %v1856 = vmul.f32 %v1792, %v1024
        %v1857 = vmul.f32 %v1793, %v1025
        %v1858 = vmul.f32 %v1794, %v1026
        %v1859 = vmul.f32 %v1795, %v1027
        %v1860 = vmul.f32 %v1796, %v1028
        %v1861 = vmul.f32 %v1797, %v1029
        %v1862 = vmul.f32 %v1798, %v1030
        %v1863 = vmul.f32 %v1799, %v1031
        %v1864 = vmul.f32 %v1800, %v1032
        %v1865 = vmul.f32 %v1801, %v1033
        %v1866 = vmul.f32 %v1802, %v1034
        %v1867 = vmul.f32 %v1803, %v1035
        %v1868 = vmul.f32 %v1804, %v1036
        %v1869 = vmul.f32 %v1805, %v1037
        %v1870 = vmul.f32 %v1806, %v1038
        %v1871 = vmul.f32 %v1807, %v1039
        %v1872 = vmul.f32 %v1808, %v1040
        %v1873 = vmul.f32 %v1809, %v1041
        %v1874 = vmul.f32 %v1810, %v1042
        %v1875 = vmul.f32 %v1811, %v1043
        %v1876 = vmul.f32 %v1812, %v1044
        %v1877 = vmul.f32 %v1813, %v1045
        %v1878 = vmul.f32 %v1814, %v1046
        %v1879 = vmul.f32 %v1815, %v1047
        %v1880 = vmul.f32 %v1816, %v1048
        %v1881 = vmul.f32 %v1817, %v1049
        %v1882 = vmul.f32 %v1818, %v1050
        %v1883 = vmul.f32 %v1819, %v1051
        %v1884 = vmul.f32 %v1820, %v1052
        %v1885 = vmul.f32 %v1821, %v1053
        %v1886 = vmul.f32 %v1822, %v1054
        %v1887 = vmul.f32 %v1823, %v1055
        %v1888 = vmul.f32 %v1824, %v1056
        %v1889 = vmul.f32 %v1825, %v1057
        %v1890 = vmul.f32 %v1826, %v1058
        %v1891 = vmul.f32 %v1827, %v1059
        %v1892 = vmul.f32 %v1828, %v1060
        %v1893 = vmul.f32 %v1829, %v1061
        %v1894 = vmul.f32 %v1830, %v1062
        %v1895 = vmul.f32 %v1831, %v1063
        %v1896 = vmul.f32 %v1832, %v1064
        %v1897 = vmul.f32 %v1833, %v1065
        %v1898 = vmul.f32 %v1834, %v1066
        %v1899 = vmul.f32 %v1835, %v1067
        %v1900 = vmul.f32 %v1836, %v1068
        %v1901 = vmul.f32 %v1837, %v1069
        %v1902 = vmul.f32 %v1838, %v1070
        %v1903 = vmul.f32 %v1839, %v1071
        %v1904 = vmul.f32 %v1840, %v1072
        %v1905 = vmul.f32 %v1841, %v1073
        %v1906 = vmul.f32 %v1842, %v1074
        %v1907 = vmul.f32 %v1843, %v1075
        %v1908 = vmul.f32 %v1844, %v1076
        %v1909 = vmul.f32 %v1845, %v1077
        %v1910 = vmul.f32 %v1846, %v1078
        %v1911 = vmul.f32 %v1847, %v1079
        %v1912 = vmul.f32 %v1848, %v1080
        %v1913 = vmul.f32 %v1849, %v1081
        %v1914 = vmul.f32 %v1850, %v1082
        %v1915 = vmul.f32 %v1851, %v1083
        %v1916 = vmul.f32 %v1852, %v1084
        %v1917 = vmul.f32 %v1853, %v1085
        %v1918 = vmul.f32 %v1854, %v1086
        %v1919 = vmul.f32 %v1855, %v1087
        %v1920 = vpack.c.bf16 %v1857, %v1856
        %v1921 = vpack.c.bf16 %v1859, %v1858
        %v1922 = vpack.c.bf16 %v1861, %v1860
        %v1923 = vpack.c.bf16 %v1863, %v1862
        %v1924 = vpack.c.bf16 %v1865, %v1864
        %v1925 = vpack.c.bf16 %v1867, %v1866
        %v1926 = vpack.c.bf16 %v1869, %v1868
        %v1927 = vpack.c.bf16 %v1871, %v1870
        %v1928 = vpack.c.bf16 %v1873, %v1872
        %v1929 = vpack.c.bf16 %v1875, %v1874
        %v1930 = vpack.c.bf16 %v1877, %v1876
        %v1931 = vpack.c.bf16 %v1879, %v1878
        %v1932 = vpack.c.bf16 %v1881, %v1880
        %v1933 = vpack.c.bf16 %v1883, %v1882
        %v1934 = vpack.c.bf16 %v1885, %v1884
        %v1935 = vpack.c.bf16 %v1887, %v1886
        %v1936 = vpack.c.bf16 %v1889, %v1888
        %v1937 = vpack.c.bf16 %v1891, %v1890
        %v1938 = vpack.c.bf16 %v1893, %v1892
        %v1939 = vpack.c.bf16 %v1895, %v1894
        %v1940 = vpack.c.bf16 %v1897, %v1896
        %v1941 = vpack.c.bf16 %v1899, %v1898
        %v1942 = vpack.c.bf16 %v1901, %v1900
        %v1943 = vpack.c.bf16 %v1903, %v1902
        %v1944 = vpack.c.bf16 %v1905, %v1904
        %v1945 = vpack.c.bf16 %v1907, %v1906
        %v1946 = vpack.c.bf16 %v1909, %v1908
        %v1947 = vpack.c.bf16 %v1911, %v1910
        %v1948 = vpack.c.bf16 %v1913, %v1912
        %v1949 = vpack.c.bf16 %v1915, %v1914
        %v1950 = vpack.c.bf16 %v1917, %v1916
        %v1951 = vpack.c.bf16 %v1919, %v1918
        %v1952 = vld [vmem:[%s132] sm:$0xff]
        %1953 = vxpose.xlu0.c.b16.start [1/8] %v732, 128
        %1954 = vxpose.xlu0.c.b16.cont [2/8] %v733, 128
        %1955 = vxpose.xlu0.c.b16.cont [3/8] %v734, 128
        %1956 = vxpose.xlu0.c.b16.cont [4/8] %v735, 128
        %1957 = vxpose.xlu0.c.b16.cont [5/8] %v736, 128
        %1958 = vxpose.xlu0.c.b16.cont [6/8] %v737, 128
        %1959 = vxpose.xlu0.c.b16.cont [7/8] %v738, 128
        %1960 = vxpose.xlu0.c.b16.end [8/8] %v739, 128
        %v1961 = vpop.trf.xlu0
        %v1962 = vpop.trf.xlu0
        %v1963 = vpop.trf.xlu0
        %v1964 = vpop.trf.xlu0
        %v1965 = vpop.trf.xlu0
        %v1966 = vpop.trf.xlu0
        %v1967 = vpop.trf.xlu0
        %v1968 = vpop.trf.xlu0
        %1969 = vxpose.xlu0.c.b16.start [1/8] %v740, 128
        %1970 = vxpose.xlu0.c.b16.cont [2/8] %v741, 128
        %1971 = vxpose.xlu0.c.b16.cont [3/8] %v742, 128
        %1972 = vxpose.xlu0.c.b16.cont [4/8] %v743, 128
        %1973 = vxpose.xlu0.c.b16.cont [5/8] %v744, 128
        %1974 = vxpose.xlu0.c.b16.cont [6/8] %v745, 128
        %1975 = vxpose.xlu0.c.b16.cont [7/8] %v746, 128
        %1976 = vxpose.xlu0.c.b16.end [8/8] %v747, 128
        %v1977 = vpop.trf.xlu0
        %v1978 = vpop.trf.xlu0
        %v1979 = vpop.trf.xlu0
        %v1980 = vpop.trf.xlu0
        %v1981 = vpop.trf.xlu0
        %v1982 = vpop.trf.xlu0
        %v1983 = vpop.trf.xlu0
        %v1984 = vpop.trf.xlu0
        %1985 = vxpose.xlu0.c.b16.start [1/8] %v748, 128
        %1986 = vxpose.xlu0.c.b16.cont [2/8] %v749, 128
        %1987 = vxpose.xlu0.c.b16.cont [3/8] %v750, 128
        %1988 = vxpose.xlu0.c.b16.cont [4/8] %v751, 128
        %1989 = vxpose.xlu0.c.b16.cont [5/8] %v752, 128
        %1990 = vxpose.xlu0.c.b16.cont [6/8] %v753, 128
        %1991 = vxpose.xlu0.c.b16.cont [7/8] %v754, 128
        %1992 = vxpose.xlu0.c.b16.end [8/8] %v755, 128
        %v1993 = vpop.trf.xlu0
        %v1994 = vpop.trf.xlu0
        %v1995 = vpop.trf.xlu0
        %v1996 = vpop.trf.xlu0
        %v1997 = vpop.trf.xlu0
        %v1998 = vpop.trf.xlu0
        %v1999 = vpop.trf.xlu0
        %v2000 = vpop.trf.xlu0
        %2001 = vxpose.xlu0.c.b16.start [1/8] %v756, 128
        %2002 = vxpose.xlu0.c.b16.cont [2/8] %v757, 128
        %2003 = vxpose.xlu0.c.b16.cont [3/8] %v758, 128
        %2004 = vxpose.xlu0.c.b16.cont [4/8] %v759, 128
        %2005 = vxpose.xlu0.c.b16.cont [5/8] %v760, 128
        %2006 = vxpose.xlu0.c.b16.cont [6/8] %v761, 128
        %2007 = vxpose.xlu0.c.b16.cont [7/8] %v762, 128
        %2008 = vxpose.xlu0.c.b16.end [8/8] %v763, 128
        %v2009 = vpop.trf.xlu0
        %v2010 = vpop.trf.xlu0
        %v2011 = vpop.trf.xlu0
        %v2012 = vpop.trf.xlu0
        %v2013 = vpop.trf.xlu0
        %v2014 = vpop.trf.xlu0
        %v2015 = vpop.trf.xlu0
        %v2016 = vpop.trf.xlu0
        %2017 = vmatprep.subr.bf16.mxu0 0
        %2018 = vmatpush1.bf16.msra.mxu0 %v1920
        %2019 = vmatprep.subr.bf16.mxu0 0
        %2020 = vmatpush1.bf16.msra.mxu0 %v1921
        %2021 = vmatprep.subr.bf16.mxu0 0
        %2022 = vmatpush1.bf16.msra.mxu0 %v1922
        %2023 = vmatprep.subr.bf16.mxu0 0
        %2024 = vmatpush1.bf16.msra.mxu0 %v1923
        %2025 = vmatprep.subr.bf16.mxu0 0
        %2026 = vmatpush1.bf16.msra.mxu0 %v1924
        %2027 = vmatprep.subr.bf16.mxu0 0
        %2028 = vmatpush1.bf16.msra.mxu0 %v1925
        %2029 = vmatprep.subr.bf16.mxu0 0
        %2030 = vmatpush1.bf16.msra.mxu0 %v1926
        %2031 = vmatprep.subr.bf16.mxu0 0
        %2032 = vmatpush1.bf16.msra.mxu0 %v1927
        %2033 = vmatprep.subr.bf16.mxu0 0
        %2034 = vmatpush1.bf16.msra.mxu0 %v1928
        %2035 = vmatprep.subr.bf16.mxu0 0
        %2036 = vmatpush1.bf16.msra.mxu0 %v1929
        %2037 = vmatprep.subr.bf16.mxu0 0
        %2038 = vmatpush1.bf16.msra.mxu0 %v1930
        %2039 = vmatprep.subr.bf16.mxu0 0
        %2040 = vmatpush1.bf16.msra.mxu0 %v1931
        %2041 = vmatprep.subr.bf16.mxu0 0
        %2042 = vmatpush1.bf16.msra.mxu0 %v1932
        %2043 = vmatprep.subr.bf16.mxu0 0
        %2044 = vmatpush1.bf16.msra.mxu0 %v1933
        %2045 = vmatprep.subr.bf16.mxu0 0
        %2046 = vmatpush1.bf16.msra.mxu0 %v1934
        %2047 = vmatprep.subr.bf16.mxu0 0
        %2048 = vmatpush1.bf16.msra.mxu0 %v1935
        %2049 = vmatprep.mubr.bf16.mxu0 %v1977
        %2050 = vmatmul.mubr.bf16.gmra.mrb[0].mxu0 %v1961
        %v2051 = vpop.f32.mrb[0].mxu0
        %v2052 = vadd.f32 0.0, %v2051
        %v2053 = vpop.f32.mrb[0].mxu0
        %v2054 = vpop.f32.mrb[0].mxu0
        %v2055 = vpop.f32.mrb[0].mxu0
        %2056 = vdwg.mxu0
        %2057 = vmatprep.subr.bf16.mxu0 0
        %2058 = vmatpush1.bf16.msra.mxu0 %v1936
        %2059 = vmatprep.subr.bf16.mxu0 0
        %2060 = vmatpush1.bf16.msra.mxu0 %v1937
        %2061 = vmatprep.subr.bf16.mxu0 0
        %2062 = vmatpush1.bf16.msra.mxu0 %v1938
        %2063 = vmatprep.subr.bf16.mxu0 0
        %2064 = vmatpush1.bf16.msra.mxu0 %v1939
        %2065 = vmatprep.subr.bf16.mxu0 0
        %2066 = vmatpush1.bf16.msra.mxu0 %v1940
        %2067 = vmatprep.subr.bf16.mxu0 0
        %2068 = vmatpush1.bf16.msra.mxu0 %v1941
        %2069 = vmatprep.subr.bf16.mxu0 0
        %2070 = vmatpush1.bf16.msra.mxu0 %v1942
        %2071 = vmatprep.subr.bf16.mxu0 0
        %2072 = vmatpush1.bf16.msra.mxu0 %v1943
        %2073 = vmatprep.subr.bf16.mxu0 0
        %2074 = vmatpush1.bf16.msra.mxu0 %v1944
        %2075 = vmatprep.subr.bf16.mxu0 0
        %2076 = vmatpush1.bf16.msra.mxu0 %v1945
        %2077 = vmatprep.subr.bf16.mxu0 0
        %2078 = vmatpush1.bf16.msra.mxu0 %v1946
        %2079 = vmatprep.subr.bf16.mxu0 0
        %2080 = vmatpush1.bf16.msra.mxu0 %v1947
        %2081 = vmatprep.subr.bf16.mxu0 0
        %2082 = vmatpush1.bf16.msra.mxu0 %v1948
        %2083 = vmatprep.subr.bf16.mxu0 0
        %2084 = vmatpush1.bf16.msra.mxu0 %v1949
        %2085 = vmatprep.subr.bf16.mxu0 0
        %2086 = vmatpush1.bf16.msra.mxu0 %v1950
        %2087 = vmatprep.subr.bf16.mxu0 0
        %2088 = vmatpush1.bf16.msra.mxu0 %v1951
        %2089 = vmatprep.mubr.bf16.mxu0 %v2009
        %2090 = vmatmul.mubr.bf16.gmra.mrb[0].mxu0 %v1993
        %v2091 = vpop.f32.mrb[0].mxu0
        %v2092 = vadd.f32 %v2052, %v2091
        %v2093 = vpop.f32.mrb[0].mxu0
        %v2094 = vpop.f32.mrb[0].mxu0
        %v2095 = vpop.f32.mrb[0].mxu0
        %2096 = vdwg.mxu0
        %v2097 = vadd.f32 %v1952, %v2092
        %vm2098 = vcmask 261120
        %2099 = vst.msk [vmem:[%s132] sm:$0xff] %vm2098, %v2097
        %s2100 = sand.u32 %s65, 1
        %s2101 = scalar_lea.sflag [#allocation3], %s2100
        %s2102 = sand.u32 %s65, 1
        %s2103 = smul.addr %s2102, 8
        %s2104 = scalar_lea.vmem [#allocation2], %s2103
        // Predicated region
        $region29: #{tpu_custom_call.1} parent=23 // pred_check
          %p2105 = pneg %p75
        $region30: #{tpu_custom_call.1} parent=23 // pred_check_branch
          %2107 = sbr.rel (%p2105) target = $region32
        $region31: #{tpu_custom_call.1} parent=23 // pred_region
          %s2109 = ssub.s32 128, 128
          %2110 = vsyncadd %s2101, %s2109
          %s2111 = smul.addr %s19, 128
          %s2112 = scalar_lea.hbm %s1, %s2111
          %s2114 = sshll.u32 %s2104, 4
          %s2115 = int_to_ptr.vmem [resolvable:$true] %s2114
          %2117 = dma.vmem_to_hbm [thread:$0]  %s2115, 128, %s2112, %s2101
        $region32: #{tpu_custom_call.1} parent=23 // pred_fallthru
          _
      $region24: #{tpu_custom_call.1} parent=5 // pred_fallthru
        _
      %p2118 = scmp.le.s32.totalorder 2, %s10
      // Predicated region
      $region33: #{tpu_custom_call.1} parent=5 // pred_check
        %p2119 = pneg %p2118
      $region34: #{tpu_custom_call.1} parent=5 // pred_check_branch
        %2121 = sbr.rel (%p2119) target = $region36
      $region35: #{tpu_custom_call.1} parent=5 // pred_region
        %s2122 = ssub.s32 %s10, 2
        // Predicated region
        $region37: #{tpu_custom_call.1} parent=35 // pred_check
          %p2123 = pneg %p81
        $region38: #{tpu_custom_call.1} parent=35 // pred_check_branch
          %2125 = sbr.rel (%p2123) target = $region40
        $region39: #{tpu_custom_call.1} parent=35 // pred_region
          %s2126 = sand.u32 %s66, 1
          %s2127 = scalar_lea.sflag [#allocation3], %s2126
          %s2128 = sand.u32 %s66, 1
          %s2129 = smul.addr %s2128, 8
          %s2130 = scalar_lea.vmem [#allocation2], %s2129
          %2131 = dma.done %s2127, 128
        $region40: #{tpu_custom_call.1} parent=35 // pred_fallthru
          _
      $region36: #{tpu_custom_call.1} parent=5 // pred_fallthru
        _
    $region6: #{tpu_custom_call.1} parent=1 // loop_footer
      %s14 = sadd.s32 1, %s10
    $region7: #{tpu_custom_call.1} parent=1 // loop_footer_branch
      %9 = sbr.rel target = $region3
    $region8: #{tpu_custom_call.1} parent=1 // loop_exit
      _
    %2132 = vsyncpa [#allocation3], 1
    %s2133 = scalar_lea.sflag [#allocation3], 1
    %2134 = vsyncpa %s2133, 1

</llo_original>
